<compile_context>
chip_gen: v7x
topology: tpu7x:2x2x1
jax: 0.10.0
libtpu: 0.0.40
codegen_flags: <defaults>
</compile_context>

<pallas_src>
import jax
import jax.numpy as jnp
from jax.experimental import pallas as pl
from jax.experimental.pallas import tpu as pltpu


def _round_up(x, m):
    return (x + m - 1) // m * m


def lstm_classifier_kernel(gx_ref, whh_ref, wout_ref, bout_ref, out_ref,
                           h_ref, c_ref):
    """Grid = (batch_block, time_chunk); time axis is sequential ('arbitrary').

    gx_ref  : (T_CHUNK, B_BLK, 4*Hp) f32  precomputed x@W_ih^T + b for this chunk
    whh_ref : (Hp, 4*Hp)             bf16 recurrent weight (resident)
    wout_ref: (Hp, Op)               bf16 output projection (resident)
    bout_ref: (1, Op)                f32
    out_ref : (B_BLK, Op)            f32  resident across time, written at last chunk
    h_ref/c_ref : (B_BLK, Hp)        f32  VMEM scratch carrying recurrent state
    """
    t_blk = pl.program_id(1)

    @pl.when(t_blk == 0)
    def _():
        h_ref[...] = jnp.zeros_like(h_ref)
        c_ref[...] = jnp.zeros_like(c_ref)

    t_chunk = gx_ref.shape[0]
    hp = h_ref.shape[-1]
    whh = whh_ref[...]  # load the (small) recurrent weight once per chunk

    def step(s, carry):
        h, c = carry
        # gates = gates_x[t] + h @ W_hh^T  (bf16 operands, f32 accumulation)
        gates = gx_ref[s] + jnp.dot(h.astype(jnp.bfloat16), whh,
                                    preferred_element_type=jnp.float32)
        # Hp = 128 -> each gate slice is a full lane-aligned block (free view).
        i_g = jax.nn.sigmoid(gates[:, 0 * hp:1 * hp])
        f_g = jax.nn.sigmoid(gates[:, 1 * hp:2 * hp])
        g_g = jnp.tanh(gates[:, 2 * hp:3 * hp])
        o_g = jax.nn.sigmoid(gates[:, 3 * hp:4 * hp])
        c_new = f_g * c + i_g * g_g
        h_new = o_g * jnp.tanh(c_new)
        return h_new, c_new

    h_fin, c_fin = jax.lax.fori_loop(
        0, t_chunk, step, (h_ref[...], c_ref[...]), unroll=True)
    h_ref[...] = h_fin
    c_ref[...] = c_fin

    # Last time-chunk: apply the output Linear layer (lane-dense [B_BLK, Op] store).
    @pl.when(t_blk == pl.num_programs(1) - 1)
    def _():
        out_ref[...] = (jnp.dot(h_fin.astype(jnp.bfloat16), wout_ref[...],
                                preferred_element_type=jnp.float32)
                        + bout_ref[...])


def char_nn_classifier_forward(x_tokens, params, *, t_chunk=8, b_block=8):
    """x_tokens: int32 [B, T] token ids.  Returns logits [B, output_size]."""
    emb = params["embedding"]          # [V, E]
    w_ih = params["w_ih"]              # [4H, E]  (PyTorch layout, gate order i,f,g,o)
    w_hh = params["w_hh"]              # [4H, H]
    b_ih = params["b_ih"]              # [4H]
    b_hh = params["b_hh"]              # [4H]
    w_out = params["w_out"]            # [O, H]
    b_out = params["b_out"]            # [O]

    B, T = x_tokens.shape
    H = w_hh.shape[1]
    O = w_out.shape[0]
    E = emb.shape[1]

    # Hardware-friendly padded sizes.
    Hp = _round_up(H, 128)             # lane-aligned gate blocks
    Op = _round_up(O, 128)             # lane-dense output store
    Bp = _round_up(B, b_block)         # sublane-aligned batch
    Tp = _round_up(T, t_chunk)

    # Pad each gate block separately so gate k occupies lanes [k*Hp:(k+1)*Hp].
    wih_p = (jnp.zeros((4, Hp, E), jnp.float32)
             .at[:, :H, :].set(w_ih.reshape(4, H, E)).reshape(4 * Hp, E))
    whh_p = (jnp.zeros((4, Hp, Hp), jnp.float32)
             .at[:, :H, :H].set(w_hh.reshape(4, H, H)).reshape(4 * Hp, Hp))
    b_p = (jnp.zeros((4, Hp), jnp.float32)
           .at[:, :H].set((b_ih + b_hh).reshape(4, H)).reshape(4 * Hp))
    wout_p = jnp.zeros((Op, Hp), jnp.float32).at[:O, :H].set(w_out)
    bout_p = jnp.zeros((Op,), jnp.float32).at[:O].set(b_out)

    # Embedding + input projection fused into a single [V, 4Hp] table:
    #   embed(tok) @ W_ih^T + b  ==  (emb @ W_ih^T + b)[tok]
    # This hoists the whole x-projection out of the recurrence (independent of T and B).
    proj_table = emb @ wih_p.T + b_p                     # [V, 4Hp] f32
    gates_x = jnp.take(proj_table, x_tokens, axis=0)     # [B, T, 4Hp]
    gates_x = jnp.transpose(gates_x, (1, 0, 2))          # [T, B, 4Hp] (time-major)
    # Pad batch (extra rows discarded) and pad time at the FRONT with zero
    # pre-activations: zero gates + zero state keep h = c = 0 exactly, so the leading
    # padded steps are no-ops and the last real timestep stays last.
    gates_x = jnp.pad(gates_x, ((Tp - T, 0), (0, Bp - B), (0, 0)))

    # Matmul operands for the kernel in bf16 (f32 accumulation inside the kernel).
    whh_t = whh_p.T.astype(jnp.bfloat16)                 # [Hp, 4Hp]
    wout_t = wout_p.T.astype(jnp.bfloat16)               # [Hp, Op]
    bout2 = bout_p.reshape(1, Op)                        # [1, Op] f32

    grid = (Bp // b_block, Tp // t_chunk)

    grid_spec = pltpu.PrefetchScalarGridSpec(
        num_scalar_prefetch=0,
        grid=grid,
        in_specs=[
            pl.BlockSpec((t_chunk, b_block, 4 * Hp), lambda b, t: (t, b, 0)),
            pl.BlockSpec((Hp, 4 * Hp), lambda b, t: (0, 0)),   # W_hh^T (resident)
            pl.BlockSpec((Hp, Op), lambda b, t: (0, 0)),       # W_out^T (resident)
            pl.BlockSpec((1, Op), lambda b, t: (0, 0)),        # b_out
        ],
        out_specs=pl.BlockSpec((b_block, Op), lambda b, t: (b, 0)),
        scratch_shapes=[
            pltpu.VMEM((b_block, Hp), jnp.float32),            # h state
            pltpu.VMEM((b_block, Hp), jnp.float32),            # c state
        ],
    )

    out = pl.pallas_call(
        lstm_classifier_kernel,
        out_shape=jax.ShapeDtypeStruct((Bp, Op), jnp.float32),
        grid_spec=grid_spec,
        compiler_params=pltpu.CompilerParams(
            # batch axis may shard across TensorCores (v7x); time is the recurrence.
            dimension_semantics=("parallel", "arbitrary"),
            vmem_limit_bytes=32 * 1024 * 1024,  # safe on v5e/v6e/v7x; usage here is tiny
        ),
    )(gates_x, whh_t, wout_t, bout2)

    return out[:B, :O]


def reference_forward(x_tokens, params):
    """Pure-JAX f32 reference (mirrors PyTorch nn.LSTM + Linear semantics)."""
    emb = params["embedding"]
    w_ih, w_hh = params["w_ih"], params["w_hh"]
    b_ih, b_hh = params["b_ih"], params["b_hh"]
    w_out, b_out = params["w_out"], params["b_out"]
    H = w_hh.shape[1]

    x_emb = jnp.take(emb, x_tokens, axis=0)          # [B, T, E]
    B = x_emb.shape[0]

    def step(carry, x_t):
        h, c = carry
        gates = x_t @ w_ih.T + h @ w_hh.T + b_ih + b_hh
        i = jax.nn.sigmoid(gates[:, 0 * H:1 * H])
        f = jax.nn.sigmoid(gates[:, 1 * H:2 * H])
        g = jnp.tanh(gates[:, 2 * H:3 * H])
        o = jax.nn.sigmoid(gates[:, 3 * H:4 * H])
        c = f * c + i * g
        h = o * jnp.tanh(c)
        return (h, c), None

    h0 = jnp.zeros((B, H), jnp.float32)
    c0 = jnp.zeros((B, H), jnp.float32)
    (h_last, _), _ = jax.lax.scan(step, (h0, c0), jnp.transpose(x_emb, (1, 0, 2)))
    return h_last @ w_out.T + b_out


def init_params(key, vocab_size, embedding_size, hidden_size, output_size):
    ks = jax.random.split(key, 7)
    s = 0.1
    return {
        "embedding": s * jax.random.normal(ks[0], (vocab_size, embedding_size), jnp.float32),
        "w_ih": s * jax.random.normal(ks[1], (4 * hidden_size, embedding_size), jnp.float32),
        "w_hh": s * jax.random.normal(ks[2], (4 * hidden_size, hidden_size), jnp.float32),
        "b_ih": s * jax.random.normal(ks[3], (4 * hidden_size,), jnp.float32),
        "b_hh": s * jax.random.normal(ks[4], (4 * hidden_size,), jnp.float32),
        "w_out": s * jax.random.normal(ks[5], (output_size, hidden_size), jnp.float32),
        "b_out": s * jax.random.normal(ks[6], (output_size,), jnp.float32),
    }


if __name__ == "__main__":
    # Small, deterministic config: vocab=32, E=16, H=32, O=8, batch=2, seq=16
    # (seq=16 exercises two time-chunks of 8 with state carried across grid steps).
    vocab_size, embedding_size, hidden_size, output_size = 32, 16, 32, 8
    batch, seq = 2, 16

    key = jax.random.PRNGKey(0)
    k_param, k_data = jax.random.split(key)
    params = init_params(k_param, vocab_size, embedding_size, hidden_size, output_size)
    x_tokens = jax.random.randint(k_data, (batch, seq), 0, vocab_size, dtype=jnp.int32)

    # TODO(synk): only the single-layer unidirectional DPLSTM path is implemented
    # (num_lstm_layers=1, bidirectional=False), matching the default constructor args.

    logits = char_nn_classifier_forward(x_tokens, params)
    logits = jax.block_until_ready(logits)

    ref = reference_forward(x_tokens, params)
    assert logits.shape == (batch, output_size)
    # Kernel matmuls use bf16 operands (f32 accumulation); compare against the
    # f32 reference with a tolerance well above the bf16-induced drift (~1e-3).
    assert jnp.allclose(logits, ref, atol=1e-2, rtol=1e-2), "mismatch vs reference"

    print("KERNEL_OK")
</pallas_src>

<mosaic_0001>
module attributes {stable_mosaic.version = 11 : i64} {
  func.func @lstm_classifier_kernel(%arg0: i32, %arg1: i32, %arg2: memref<8x8x512xf32, #tpu.memory_space<vmem>>, %arg3: memref<128x512xbf16, #tpu.memory_space<vmem>>, %arg4: memref<128x128xbf16, #tpu.memory_space<vmem>>, %arg5: memref<1x128xf32, #tpu.memory_space<vmem>>, %arg6: memref<8x128xf32, #tpu.memory_space<vmem>>, %arg7: memref<8x128xf32, #tpu.memory_space<vmem>>, %arg8: memref<8x128xf32, #tpu.memory_space<vmem>>) attributes {dimension_semantics = [#tpu.dimension_semantics<parallel>, #tpu.dimension_semantics<arbitrary>], iteration_bounds = array<i64: 1, 2>, scalar_prefetch = 0 : i64, scratch_operands = 2 : i64, tpu.core_type = #tpu.core_type<tc>, window_params = [{transform_indices = @transform_0, window_bounds = array<i64: 8, 8, 512>}, {pipeline_mode = #tpu.pipeline_mode<synchronous>, transform_indices = @transform_1, window_bounds = array<i64: 128, 512>}, {pipeline_mode = #tpu.pipeline_mode<synchronous>, transform_indices = @transform_2, window_bounds = array<i64: 128, 128>}, {pipeline_mode = #tpu.pipeline_mode<synchronous>, transform_indices = @transform_3, window_bounds = array<i64: 1, 128>}, {transform_indices = @transform_4, window_bounds = array<i64: 8, 128>}]} {
    %c0_i32 = arith.constant 0 : i32
    %0 = arith.cmpi eq, %arg1, %c0_i32 : i32
    %1 = arith.extui %0 : i1 to i32
    %c0_i32_0 = arith.constant 0 : i32
    %2 = arith.cmpi ne, %1, %c0_i32_0 : i32
    scf.if %2 {
      %cst_60 = arith.constant 0.000000e+00 : f32
      %259 = vector.broadcast %cst_60 : f32 to vector<8x128xf32>
      %c0_61 = arith.constant 0 : index
      %c0_62 = arith.constant 0 : index
      %260 = vector.load %arg7[%c0_61, %c0_62] : memref<8x128xf32, #tpu.memory_space<vmem>>, vector<8x128xf32>
      tpu.vector_store %arg7[%c0_61, %c0_62], %259 {strides = array<i32>} : memref<8x128xf32, #tpu.memory_space<vmem>>, vector<8x128xf32>,
      %cst_63 = arith.constant 0.000000e+00 : f32
      %261 = vector.broadcast %cst_63 : f32 to vector<8x128xf32>
      %c0_64 = arith.constant 0 : index
      %c0_65 = arith.constant 0 : index
      %262 = vector.load %arg8[%c0_64, %c0_65] : memref<8x128xf32, #tpu.memory_space<vmem>>, vector<8x128xf32>
      tpu.vector_store %arg8[%c0_64, %c0_65], %261 {strides = array<i32>} : memref<8x128xf32, #tpu.memory_space<vmem>>, vector<8x128xf32>,
    } else {
    }
    %c0 = arith.constant 0 : index
    %c0_1 = arith.constant 0 : index
    %3 = vector.load %arg3[%c0, %c0_1] : memref<128x512xbf16, #tpu.memory_space<vmem>>, vector<128x512xbf16>
    %c0_2 = arith.constant 0 : index
    %c0_3 = arith.constant 0 : index
    %4 = vector.load %arg7[%c0_2, %c0_3] : memref<8x128xf32, #tpu.memory_space<vmem>>, vector<8x128xf32>
    %c0_4 = arith.constant 0 : index
    %c0_5 = arith.constant 0 : index
    %5 = vector.load %arg8[%c0_4, %c0_5] : memref<8x128xf32, #tpu.memory_space<vmem>>, vector<8x128xf32>
    %c0_i32_6 = arith.constant 0 : i32
    %6 = arith.index_cast %c0_i32_6 : i32 to index
    %c0_7 = arith.constant 0 : index
    %c0_8 = arith.constant 0 : index
    %7 = vector.load %arg2[%6, %c0_7, %c0_8] : memref<8x8x512xf32, #tpu.memory_space<vmem>>, vector<1x8x512xf32>
    %8 = vector.shape_cast %7 : vector<1x8x512xf32> to vector<8x512xf32>
    %9 = arith.truncf %4 : vector<8x128xf32> to vector<8x128xbf16>
    %cst = arith.constant dense<0.000000e+00> : vector<8x512xf32>
    %10 = tpu.matmul %9, %3, %cst {dimension_numbers = #tpu.dot_dimension_numbers<[1], [0], [0], [1], [0, 0, 1, 1], [], []>} : vector<8x128xbf16>, vector<128x512xbf16>, vector<8x512xf32> -> vector<8x512xf32>
    %11 = arith.addf %8, %10 : vector<8x512xf32>
    %12 = vector.extract_strided_slice %11 {offsets = [0, 0], sizes = [8, 128], strides = [1, 1]} : vector<8x512xf32> to vector<8x128xf32>
    %13 = arith.negf %12 : vector<8x128xf32>
    %14 = math.exp %13 : vector<8x128xf32>
    %cst_9 = arith.constant 1.000000e+00 : f32
    %15 = vector.broadcast %cst_9 : f32 to vector<8x128xf32>
    %16 = arith.addf %15, %14 : vector<8x128xf32>
    %17 = arith.divf %15, %16 : vector<8x128xf32>
    %18 = vector.extract_strided_slice %11 {offsets = [0, 128], sizes = [8, 128], strides = [1, 1]} : vector<8x512xf32> to vector<8x128xf32>
    %19 = arith.negf %18 : vector<8x128xf32>
    %20 = math.exp %19 : vector<8x128xf32>
    %cst_10 = arith.constant 1.000000e+00 : f32
    %21 = vector.broadcast %cst_10 : f32 to vector<8x128xf32>
    %22 = arith.addf %21, %20 : vector<8x128xf32>
    %23 = arith.divf %21, %22 : vector<8x128xf32>
    %24 = vector.extract_strided_slice %11 {offsets = [0, 256], sizes = [8, 128], strides = [1, 1]} : vector<8x512xf32> to vector<8x128xf32>
    %25 = math.tanh %24 : vector<8x128xf32>
    %26 = vector.extract_strided_slice %11 {offsets = [0, 384], sizes = [8, 128], strides = [1, 1]} : vector<8x512xf32> to vector<8x128xf32>
    %27 = arith.negf %26 : vector<8x128xf32>
    %28 = math.exp %27 : vector<8x128xf32>
    %cst_11 = arith.constant 1.000000e+00 : f32
    %29 = vector.broadcast %cst_11 : f32 to vector<8x128xf32>
    %30 = arith.addf %29, %28 : vector<8x128xf32>
    %31 = arith.divf %29, %30 : vector<8x128xf32>
    %32 = arith.mulf %23, %5 : vector<8x128xf32>
    %33 = arith.mulf %17, %25 : vector<8x128xf32>
    %34 = arith.addf %32, %33 : vector<8x128xf32>
    %35 = math.tanh %34 : vector<8x128xf32>
    %36 = arith.mulf %31, %35 : vector<8x128xf32>
    %c1_i32 = arith.constant 1 : i32
    %37 = arith.index_cast %c1_i32 : i32 to index
    %c0_12 = arith.constant 0 : index
    %c0_13 = arith.constant 0 : index
    %38 = vector.load %arg2[%37, %c0_12, %c0_13] : memref<8x8x512xf32, #tpu.memory_space<vmem>>, vector<1x8x512xf32>
    %39 = vector.shape_cast %38 : vector<1x8x512xf32> to vector<8x512xf32>
    %40 = arith.truncf %36 : vector<8x128xf32> to vector<8x128xbf16>
    %cst_14 = arith.constant dense<0.000000e+00> : vector<8x512xf32>
    %41 = tpu.matmul %40, %3, %cst_14 {dimension_numbers = #tpu.dot_dimension_numbers<[1], [0], [0], [1], [0, 0, 1, 1], [], []>} : vector<8x128xbf16>, vector<128x512xbf16>, vector<8x512xf32> -> vector<8x512xf32>
    %42 = arith.addf %39, %41 : vector<8x512xf32>
    %43 = vector.extract_strided_slice %42 {offsets = [0, 0], sizes = [8, 128], strides = [1, 1]} : vector<8x512xf32> to vector<8x128xf32>
    %44 = arith.negf %43 : vector<8x128xf32>
    %45 = math.exp %44 : vector<8x128xf32>
    %cst_15 = arith.constant 1.000000e+00 : f32
    %46 = vector.broadcast %cst_15 : f32 to vector<8x128xf32>
    %47 = arith.addf %46, %45 : vector<8x128xf32>
    %48 = arith.divf %46, %47 : vector<8x128xf32>
    %49 = vector.extract_strided_slice %42 {offsets = [0, 128], sizes = [8, 128], strides = [1, 1]} : vector<8x512xf32> to vector<8x128xf32>
    %50 = arith.negf %49 : vector<8x128xf32>
    %51 = math.exp %50 : vector<8x128xf32>
    %cst_16 = arith.constant 1.000000e+00 : f32
    %52 = vector.broadcast %cst_16 : f32 to vector<8x128xf32>
    %53 = arith.addf %52, %51 : vector<8x128xf32>
    %54 = arith.divf %52, %53 : vector<8x128xf32>
    %55 = vector.extract_strided_slice %42 {offsets = [0, 256], sizes = [8, 128], strides = [1, 1]} : vector<8x512xf32> to vector<8x128xf32>
    %56 = math.tanh %55 : vector<8x128xf32>
    %57 = vector.extract_strided_slice %42 {offsets = [0, 384], sizes = [8, 128], strides = [1, 1]} : vector<8x512xf32> to vector<8x128xf32>
    %58 = arith.negf %57 : vector<8x128xf32>
    %59 = math.exp %58 : vector<8x128xf32>
    %cst_17 = arith.constant 1.000000e+00 : f32
    %60 = vector.broadcast %cst_17 : f32 to vector<8x128xf32>
    %61 = arith.addf %60, %59 : vector<8x128xf32>
    %62 = arith.divf %60, %61 : vector<8x128xf32>
    %63 = arith.mulf %54, %34 : vector<8x128xf32>
    %64 = arith.mulf %48, %56 : vector<8x128xf32>
    %65 = arith.addf %63, %64 : vector<8x128xf32>
    %66 = math.tanh %65 : vector<8x128xf32>
    %67 = arith.mulf %62, %66 : vector<8x128xf32>
    %c2_i32 = arith.constant 2 : i32
    %68 = arith.index_cast %c2_i32 : i32 to index
    %c0_18 = arith.constant 0 : index
    %c0_19 = arith.constant 0 : index
    %69 = vector.load %arg2[%68, %c0_18, %c0_19] : memref<8x8x512xf32, #tpu.memory_space<vmem>>, vector<1x8x512xf32>
    %70 = vector.shape_cast %69 : vector<1x8x512xf32> to vector<8x512xf32>
    %71 = arith.truncf %67 : vector<8x128xf32> to vector<8x128xbf16>
    %cst_20 = arith.constant dense<0.000000e+00> : vector<8x512xf32>
    %72 = tpu.matmul %71, %3, %cst_20 {dimension_numbers = #tpu.dot_dimension_numbers<[1], [0], [0], [1], [0, 0, 1, 1], [], []>} : vector<8x128xbf16>, vector<128x512xbf16>, vector<8x512xf32> -> vector<8x512xf32>
    %73 = arith.addf %70, %72 : vector<8x512xf32>
    %74 = vector.extract_strided_slice %73 {offsets = [0, 0], sizes = [8, 128], strides = [1, 1]} : vector<8x512xf32> to vector<8x128xf32>
    %75 = arith.negf %74 : vector<8x128xf32>
    %76 = math.exp %75 : vector<8x128xf32>
    %cst_21 = arith.constant 1.000000e+00 : f32
    %77 = vector.broadcast %cst_21 : f32 to vector<8x128xf32>
    %78 = arith.addf %77, %76 : vector<8x128xf32>
    %79 = arith.divf %77, %78 : vector<8x128xf32>
    %80 = vector.extract_strided_slice %73 {offsets = [0, 128], sizes = [8, 128], strides = [1, 1]} : vector<8x512xf32> to vector<8x128xf32>
    %81 = arith.negf %80 : vector<8x128xf32>
    %82 = math.exp %81 : vector<8x128xf32>
    %cst_22 = arith.constant 1.000000e+00 : f32
    %83 = vector.broadcast %cst_22 : f32 to vector<8x128xf32>
    %84 = arith.addf %83, %82 : vector<8x128xf32>
    %85 = arith.divf %83, %84 : vector<8x128xf32>
    %86 = vector.extract_strided_slice %73 {offsets = [0, 256], sizes = [8, 128], strides = [1, 1]} : vector<8x512xf32> to vector<8x128xf32>
    %87 = math.tanh %86 : vector<8x128xf32>
    %88 = vector.extract_strided_slice %73 {offsets = [0, 384], sizes = [8, 128], strides = [1, 1]} : vector<8x512xf32> to vector<8x128xf32>
    %89 = arith.negf %88 : vector<8x128xf32>
    %90 = math.exp %89 : vector<8x128xf32>
    %cst_23 = arith.constant 1.000000e+00 : f32
    %91 = vector.broadcast %cst_23 : f32 to vector<8x128xf32>
    %92 = arith.addf %91, %90 : vector<8x128xf32>
    %93 = arith.divf %91, %92 : vector<8x128xf32>
    %94 = arith.mulf %85, %65 : vector<8x128xf32>
    %95 = arith.mulf %79, %87 : vector<8x128xf32>
    %96 = arith.addf %94, %95 : vector<8x128xf32>
    %97 = math.tanh %96 : vector<8x128xf32>
    %98 = arith.mulf %93, %97 : vector<8x128xf32>
    %c3_i32 = arith.constant 3 : i32
    %99 = arith.index_cast %c3_i32 : i32 to index
    %c0_24 = arith.constant 0 : index
    %c0_25 = arith.constant 0 : index
    %100 = vector.load %arg2[%99, %c0_24, %c0_25] : memref<8x8x512xf32, #tpu.memory_space<vmem>>, vector<1x8x512xf32>
    %101 = vector.shape_cast %100 : vector<1x8x512xf32> to vector<8x512xf32>
    %102 = arith.truncf %98 : vector<8x128xf32> to vector<8x128xbf16>
    %cst_26 = arith.constant dense<0.000000e+00> : vector<8x512xf32>
    %103 = tpu.matmul %102, %3, %cst_26 {dimension_numbers = #tpu.dot_dimension_numbers<[1], [0], [0], [1], [0, 0, 1, 1], [], []>} : vector<8x128xbf16>, vector<128x512xbf16>, vector<8x512xf32> -> vector<8x512xf32>
    %104 = arith.addf %101, %103 : vector<8x512xf32>
    %105 = vector.extract_strided_slice %104 {offsets = [0, 0], sizes = [8, 128], strides = [1, 1]} : vector<8x512xf32> to vector<8x128xf32>
    %106 = arith.negf %105 : vector<8x128xf32>
    %107 = math.exp %106 : vector<8x128xf32>
    %cst_27 = arith.constant 1.000000e+00 : f32
    %108 = vector.broadcast %cst_27 : f32 to vector<8x128xf32>
    %109 = arith.addf %108, %107 : vector<8x128xf32>
    %110 = arith.divf %108, %109 : vector<8x128xf32>
    %111 = vector.extract_strided_slice %104 {offsets = [0, 128], sizes = [8, 128], strides = [1, 1]} : vector<8x512xf32> to vector<8x128xf32>
    %112 = arith.negf %111 : vector<8x128xf32>
    %113 = math.exp %112 : vector<8x128xf32>
    %cst_28 = arith.constant 1.000000e+00 : f32
    %114 = vector.broadcast %cst_28 : f32 to vector<8x128xf32>
    %115 = arith.addf %114, %113 : vector<8x128xf32>
    %116 = arith.divf %114, %115 : vector<8x128xf32>
    %117 = vector.extract_strided_slice %104 {offsets = [0, 256], sizes = [8, 128], strides = [1, 1]} : vector<8x512xf32> to vector<8x128xf32>
    %118 = math.tanh %117 : vector<8x128xf32>
    %119 = vector.extract_strided_slice %104 {offsets = [0, 384], sizes = [8, 128], strides = [1, 1]} : vector<8x512xf32> to vector<8x128xf32>
    %120 = arith.negf %119 : vector<8x128xf32>
    %121 = math.exp %120 : vector<8x128xf32>
    %cst_29 = arith.constant 1.000000e+00 : f32
    %122 = vector.broadcast %cst_29 : f32 to vector<8x128xf32>
    %123 = arith.addf %122, %121 : vector<8x128xf32>
    %124 = arith.divf %122, %123 : vector<8x128xf32>
    %125 = arith.mulf %116, %96 : vector<8x128xf32>
    %126 = arith.mulf %110, %118 : vector<8x128xf32>
    %127 = arith.addf %125, %126 : vector<8x128xf32>
    %128 = math.tanh %127 : vector<8x128xf32>
    %129 = arith.mulf %124, %128 : vector<8x128xf32>
    %c4_i32 = arith.constant 4 : i32
    %130 = arith.index_cast %c4_i32 : i32 to index
    %c0_30 = arith.constant 0 : index
    %c0_31 = arith.constant 0 : index
    %131 = vector.load %arg2[%130, %c0_30, %c0_31] : memref<8x8x512xf32, #tpu.memory_space<vmem>>, vector<1x8x512xf32>
    %132 = vector.shape_cast %131 : vector<1x8x512xf32> to vector<8x512xf32>
    %133 = arith.truncf %129 : vector<8x128xf32> to vector<8x128xbf16>
    %cst_32 = arith.constant dense<0.000000e+00> : vector<8x512xf32>
    %134 = tpu.matmul %133, %3, %cst_32 {dimension_numbers = #tpu.dot_dimension_numbers<[1], [0], [0], [1], [0, 0, 1, 1], [], []>} : vector<8x128xbf16>, vector<128x512xbf16>, vector<8x512xf32> -> vector<8x512xf32>
    %135 = arith.addf %132, %134 : vector<8x512xf32>
    %136 = vector.extract_strided_slice %135 {offsets = [0, 0], sizes = [8, 128], strides = [1, 1]} : vector<8x512xf32> to vector<8x128xf32>
    %137 = arith.negf %136 : vector<8x128xf32>
    %138 = math.exp %137 : vector<8x128xf32>
    %cst_33 = arith.constant 1.000000e+00 : f32
    %139 = vector.broadcast %cst_33 : f32 to vector<8x128xf32>
    %140 = arith.addf %139, %138 : vector<8x128xf32>
    %141 = arith.divf %139, %140 : vector<8x128xf32>
    %142 = vector.extract_strided_slice %135 {offsets = [0, 128], sizes = [8, 128], strides = [1, 1]} : vector<8x512xf32> to vector<8x128xf32>
    %143 = arith.negf %142 : vector<8x128xf32>
    %144 = math.exp %143 : vector<8x128xf32>
    %cst_34 = arith.constant 1.000000e+00 : f32
    %145 = vector.broadcast %cst_34 : f32 to vector<8x128xf32>
    %146 = arith.addf %145, %144 : vector<8x128xf32>
    %147 = arith.divf %145, %146 : vector<8x128xf32>
    %148 = vector.extract_strided_slice %135 {offsets = [0, 256], sizes = [8, 128], strides = [1, 1]} : vector<8x512xf32> to vector<8x128xf32>
    %149 = math.tanh %148 : vector<8x128xf32>
    %150 = vector.extract_strided_slice %135 {offsets = [0, 384], sizes = [8, 128], strides = [1, 1]} : vector<8x512xf32> to vector<8x128xf32>
    %151 = arith.negf %150 : vector<8x128xf32>
    %152 = math.exp %151 : vector<8x128xf32>
    %cst_35 = arith.constant 1.000000e+00 : f32
    %153 = vector.broadcast %cst_35 : f32 to vector<8x128xf32>
    %154 = arith.addf %153, %152 : vector<8x128xf32>
    %155 = arith.divf %153, %154 : vector<8x128xf32>
    %156 = arith.mulf %147, %127 : vector<8x128xf32>
    %157 = arith.mulf %141, %149 : vector<8x128xf32>
    %158 = arith.addf %156, %157 : vector<8x128xf32>
    %159 = math.tanh %158 : vector<8x128xf32>
    %160 = arith.mulf %155, %159 : vector<8x128xf32>
    %c5_i32 = arith.constant 5 : i32
    %161 = arith.index_cast %c5_i32 : i32 to index
    %c0_36 = arith.constant 0 : index
    %c0_37 = arith.constant 0 : index
    %162 = vector.load %arg2[%161, %c0_36, %c0_37] : memref<8x8x512xf32, #tpu.memory_space<vmem>>, vector<1x8x512xf32>
    %163 = vector.shape_cast %162 : vector<1x8x512xf32> to vector<8x512xf32>
    %164 = arith.truncf %160 : vector<8x128xf32> to vector<8x128xbf16>
    %cst_38 = arith.constant dense<0.000000e+00> : vector<8x512xf32>
    %165 = tpu.matmul %164, %3, %cst_38 {dimension_numbers = #tpu.dot_dimension_numbers<[1], [0], [0], [1], [0, 0, 1, 1], [], []>} : vector<8x128xbf16>, vector<128x512xbf16>, vector<8x512xf32> -> vector<8x512xf32>
    %166 = arith.addf %163, %165 : vector<8x512xf32>
    %167 = vector.extract_strided_slice %166 {offsets = [0, 0], sizes = [8, 128], strides = [1, 1]} : vector<8x512xf32> to vector<8x128xf32>
    %168 = arith.negf %167 : vector<8x128xf32>
    %169 = math.exp %168 : vector<8x128xf32>
    %cst_39 = arith.constant 1.000000e+00 : f32
    %170 = vector.broadcast %cst_39 : f32 to vector<8x128xf32>
    %171 = arith.addf %170, %169 : vector<8x128xf32>
    %172 = arith.divf %170, %171 : vector<8x128xf32>
    %173 = vector.extract_strided_slice %166 {offsets = [0, 128], sizes = [8, 128], strides = [1, 1]} : vector<8x512xf32> to vector<8x128xf32>
    %174 = arith.negf %173 : vector<8x128xf32>
    %175 = math.exp %174 : vector<8x128xf32>
    %cst_40 = arith.constant 1.000000e+00 : f32
    %176 = vector.broadcast %cst_40 : f32 to vector<8x128xf32>
    %177 = arith.addf %176, %175 : vector<8x128xf32>
    %178 = arith.divf %176, %177 : vector<8x128xf32>
    %179 = vector.extract_strided_slice %166 {offsets = [0, 256], sizes = [8, 128], strides = [1, 1]} : vector<8x512xf32> to vector<8x128xf32>
    %180 = math.tanh %179 : vector<8x128xf32>
    %181 = vector.extract_strided_slice %166 {offsets = [0, 384], sizes = [8, 128], strides = [1, 1]} : vector<8x512xf32> to vector<8x128xf32>
    %182 = arith.negf %181 : vector<8x128xf32>
    %183 = math.exp %182 : vector<8x128xf32>
    %cst_41 = arith.constant 1.000000e+00 : f32
    %184 = vector.broadcast %cst_41 : f32 to vector<8x128xf32>
    %185 = arith.addf %184, %183 : vector<8x128xf32>
    %186 = arith.divf %184, %185 : vector<8x128xf32>
    %187 = arith.mulf %178, %158 : vector<8x128xf32>
    %188 = arith.mulf %172, %180 : vector<8x128xf32>
    %189 = arith.addf %187, %188 : vector<8x128xf32>
    %190 = math.tanh %189 : vector<8x128xf32>
    %191 = arith.mulf %186, %190 : vector<8x128xf32>
    %c6_i32 = arith.constant 6 : i32
    %192 = arith.index_cast %c6_i32 : i32 to index
    %c0_42 = arith.constant 0 : index
    %c0_43 = arith.constant 0 : index
    %193 = vector.load %arg2[%192, %c0_42, %c0_43] : memref<8x8x512xf32, #tpu.memory_space<vmem>>, vector<1x8x512xf32>
    %194 = vector.shape_cast %193 : vector<1x8x512xf32> to vector<8x512xf32>
    %195 = arith.truncf %191 : vector<8x128xf32> to vector<8x128xbf16>
    %cst_44 = arith.constant dense<0.000000e+00> : vector<8x512xf32>
    %196 = tpu.matmul %195, %3, %cst_44 {dimension_numbers = #tpu.dot_dimension_numbers<[1], [0], [0], [1], [0, 0, 1, 1], [], []>} : vector<8x128xbf16>, vector<128x512xbf16>, vector<8x512xf32> -> vector<8x512xf32>
    %197 = arith.addf %194, %196 : vector<8x512xf32>
    %198 = vector.extract_strided_slice %197 {offsets = [0, 0], sizes = [8, 128], strides = [1, 1]} : vector<8x512xf32> to vector<8x128xf32>
    %199 = arith.negf %198 : vector<8x128xf32>
    %200 = math.exp %199 : vector<8x128xf32>
    %cst_45 = arith.constant 1.000000e+00 : f32
    %201 = vector.broadcast %cst_45 : f32 to vector<8x128xf32>
    %202 = arith.addf %201, %200 : vector<8x128xf32>
    %203 = arith.divf %201, %202 : vector<8x128xf32>
    %204 = vector.extract_strided_slice %197 {offsets = [0, 128], sizes = [8, 128], strides = [1, 1]} : vector<8x512xf32> to vector<8x128xf32>
    %205 = arith.negf %204 : vector<8x128xf32>
    %206 = math.exp %205 : vector<8x128xf32>
    %cst_46 = arith.constant 1.000000e+00 : f32
    %207 = vector.broadcast %cst_46 : f32 to vector<8x128xf32>
    %208 = arith.addf %207, %206 : vector<8x128xf32>
    %209 = arith.divf %207, %208 : vector<8x128xf32>
    %210 = vector.extract_strided_slice %197 {offsets = [0, 256], sizes = [8, 128], strides = [1, 1]} : vector<8x512xf32> to vector<8x128xf32>
    %211 = math.tanh %210 : vector<8x128xf32>
    %212 = vector.extract_strided_slice %197 {offsets = [0, 384], sizes = [8, 128], strides = [1, 1]} : vector<8x512xf32> to vector<8x128xf32>
    %213 = arith.negf %212 : vector<8x128xf32>
    %214 = math.exp %213 : vector<8x128xf32>
    %cst_47 = arith.constant 1.000000e+00 : f32
    %215 = vector.broadcast %cst_47 : f32 to vector<8x128xf32>
    %216 = arith.addf %215, %214 : vector<8x128xf32>
    %217 = arith.divf %215, %216 : vector<8x128xf32>
    %218 = arith.mulf %209, %189 : vector<8x128xf32>
    %219 = arith.mulf %203, %211 : vector<8x128xf32>
    %220 = arith.addf %218, %219 : vector<8x128xf32>
    %221 = math.tanh %220 : vector<8x128xf32>
    %222 = arith.mulf %217, %221 : vector<8x128xf32>
    %c7_i32 = arith.constant 7 : i32
    %223 = arith.index_cast %c7_i32 : i32 to index
    %c0_48 = arith.constant 0 : index
    %c0_49 = arith.constant 0 : index
    %224 = vector.load %arg2[%223, %c0_48, %c0_49] : memref<8x8x512xf32, #tpu.memory_space<vmem>>, vector<1x8x512xf32>
    %225 = vector.shape_cast %224 : vector<1x8x512xf32> to vector<8x512xf32>
    %226 = arith.truncf %222 : vector<8x128xf32> to vector<8x128xbf16>
    %cst_50 = arith.constant dense<0.000000e+00> : vector<8x512xf32>
    %227 = tpu.matmul %226, %3, %cst_50 {dimension_numbers = #tpu.dot_dimension_numbers<[1], [0], [0], [1], [0, 0, 1, 1], [], []>} : vector<8x128xbf16>, vector<128x512xbf16>, vector<8x512xf32> -> vector<8x512xf32>
    %228 = arith.addf %225, %227 : vector<8x512xf32>
    %229 = vector.extract_strided_slice %228 {offsets = [0, 0], sizes = [8, 128], strides = [1, 1]} : vector<8x512xf32> to vector<8x128xf32>
    %230 = arith.negf %229 : vector<8x128xf32>
    %231 = math.exp %230 : vector<8x128xf32>
    %cst_51 = arith.constant 1.000000e+00 : f32
    %232 = vector.broadcast %cst_51 : f32 to vector<8x128xf32>
    %233 = arith.addf %232, %231 : vector<8x128xf32>
    %234 = arith.divf %232, %233 : vector<8x128xf32>
    %235 = vector.extract_strided_slice %228 {offsets = [0, 128], sizes = [8, 128], strides = [1, 1]} : vector<8x512xf32> to vector<8x128xf32>
    %236 = arith.negf %235 : vector<8x128xf32>
    %237 = math.exp %236 : vector<8x128xf32>
    %cst_52 = arith.constant 1.000000e+00 : f32
    %238 = vector.broadcast %cst_52 : f32 to vector<8x128xf32>
    %239 = arith.addf %238, %237 : vector<8x128xf32>
    %240 = arith.divf %238, %239 : vector<8x128xf32>
    %241 = vector.extract_strided_slice %228 {offsets = [0, 256], sizes = [8, 128], strides = [1, 1]} : vector<8x512xf32> to vector<8x128xf32>
    %242 = math.tanh %241 : vector<8x128xf32>
    %243 = vector.extract_strided_slice %228 {offsets = [0, 384], sizes = [8, 128], strides = [1, 1]} : vector<8x512xf32> to vector<8x128xf32>
    %244 = arith.negf %243 : vector<8x128xf32>
    %245 = math.exp %244 : vector<8x128xf32>
    %cst_53 = arith.constant 1.000000e+00 : f32
    %246 = vector.broadcast %cst_53 : f32 to vector<8x128xf32>
    %247 = arith.addf %246, %245 : vector<8x128xf32>
    %248 = arith.divf %246, %247 : vector<8x128xf32>
    %249 = arith.mulf %240, %220 : vector<8x128xf32>
    %250 = arith.mulf %234, %242 : vector<8x128xf32>
    %251 = arith.addf %249, %250 : vector<8x128xf32>
    %252 = math.tanh %251 : vector<8x128xf32>
    %253 = arith.mulf %248, %252 : vector<8x128xf32>
    %c8_i32 = arith.constant 8 : i32
    %c0_54 = arith.constant 0 : index
    %c0_55 = arith.constant 0 : index
    %254 = vector.load %arg7[%c0_54, %c0_55] : memref<8x128xf32, #tpu.memory_space<vmem>>, vector<8x128xf32>
    tpu.vector_store %arg7[%c0_54, %c0_55], %253 {strides = array<i32>} : memref<8x128xf32, #tpu.memory_space<vmem>>, vector<8x128xf32>,
    %c0_56 = arith.constant 0 : index
    %c0_57 = arith.constant 0 : index
    %255 = vector.load %arg8[%c0_56, %c0_57] : memref<8x128xf32, #tpu.memory_space<vmem>>, vector<8x128xf32>
    tpu.vector_store %arg8[%c0_56, %c0_57], %251 {strides = array<i32>} : memref<8x128xf32, #tpu.memory_space<vmem>>, vector<8x128xf32>,
    %c1_i32_58 = arith.constant 1 : i32
    %256 = arith.cmpi eq, %arg1, %c1_i32_58 : i32
    %257 = arith.extui %256 : i1 to i32
    %c0_i32_59 = arith.constant 0 : i32
    %258 = arith.cmpi ne, %257, %c0_i32_59 : i32
    scf.if %258 {
      %259 = arith.truncf %253 : vector<8x128xf32> to vector<8x128xbf16>
      %c0_60 = arith.constant 0 : index
      %c0_61 = arith.constant 0 : index
      %260 = vector.load %arg4[%c0_60, %c0_61] : memref<128x128xbf16, #tpu.memory_space<vmem>>, vector<128x128xbf16>
      %cst_62 = arith.constant dense<0.000000e+00> : vector<8x128xf32>
      %261 = tpu.matmul %259, %260, %cst_62 {dimension_numbers = #tpu.dot_dimension_numbers<[1], [0], [0], [1], [0, 0, 1, 1], [], []>} : vector<8x128xbf16>, vector<128x128xbf16>, vector<8x128xf32> -> vector<8x128xf32>
      %c0_63 = arith.constant 0 : index
      %c0_64 = arith.constant 0 : index
      %262 = vector.load %arg5[%c0_63, %c0_64] : memref<1x128xf32, #tpu.memory_space<vmem>>, vector<1x128xf32>
      %263 = vector.broadcast %262 : vector<1x128xf32> to vector<8x128xf32>
      %264 = arith.addf %261, %263 : vector<8x128xf32>
      %c0_65 = arith.constant 0 : index
      %c0_66 = arith.constant 0 : index
      %265 = vector.load %arg6[%c0_65, %c0_66] : memref<8x128xf32, #tpu.memory_space<vmem>>, vector<8x128xf32>
      tpu.vector_store %arg6[%c0_65, %c0_66], %264 {strides = array<i32>} : memref<8x128xf32, #tpu.memory_space<vmem>>, vector<8x128xf32>,
    } else {
    }
    return
  }
  func.func @transform_0(%arg0: i32, %arg1: i32) -> (i32, i32, i32) {
    %c0_i32 = arith.constant 0 : i32
    %c0_i32_0 = arith.constant 0 : i32
    return %arg1, %arg0, %c0_i32 : i32, i32, i32
  }
  func.func @transform_1(%arg0: i32, %arg1: i32) -> (i32, i32) {
    %c0_i32 = arith.constant 0 : i32
    %c0_i32_0 = arith.constant 0 : i32
    %c0_i32_1 = arith.constant 0 : i32
    return %c0_i32, %c0_i32_0 : i32, i32
  }
  func.func @transform_2(%arg0: i32, %arg1: i32) -> (i32, i32) {
    %c0_i32 = arith.constant 0 : i32
    %c0_i32_0 = arith.constant 0 : i32
    %c0_i32_1 = arith.constant 0 : i32
    return %c0_i32, %c0_i32_0 : i32, i32
  }
  func.func @transform_3(%arg0: i32, %arg1: i32) -> (i32, i32) {
    %c0_i32 = arith.constant 0 : i32
    %c0_i32_0 = arith.constant 0 : i32
    %c0_i32_1 = arith.constant 0 : i32
    return %c0_i32, %c0_i32_0 : i32, i32
  }
  func.func @transform_4(%arg0: i32, %arg1: i32) -> (i32, i32) {
    %c0_i32 = arith.constant 0 : i32
    %c0_i32_0 = arith.constant 0 : i32
    return %arg0, %c0_i32 : i32, i32
  }
}

</mosaic_0001>

<llo_original>
// kernel: tpu_custom_call.1
$region0: #{tpu_custom_call.1}
  #allocation0 [shape = 'u32[]', space=smem, size = 0x4, offset = 0x4, fixed_abs, tag = 'smem constant byte address 0x4 - core index']
  #allocation1 [shape = 'u32[144,128]{1,0:T(1,128)}', space=vmem, size = 0x12000, scoped, tag = 'internal scratch']
  #allocation2 [shape = 'f32[8,128]{1,0:T(8,128)}', space=vmem, size = 0x1000, scoped, tag = 'scratch operand']
  #allocation3 [shape = 'f32[8,128]{1,0:T(8,128)}', space=vmem, size = 0x1000, scoped, tag = 'scratch operand']
  %s0 = inlined_call_operand.hbm [shape: f32[16,8,512], index: 0, kind: input, shape index: {}]
  %s1 = inlined_call_operand.hbm [shape: bf16[128,512], index: 1, kind: input, shape index: {}]
  %s2 = inlined_call_operand.hbm [shape: bf16[128,128], index: 2, kind: input, shape index: {}]
  %s3 = inlined_call_operand.vmem [shape: f32[1,128], index: 3, kind: input, shape index: {}]
  %s4 = inlined_call_operand.hbm [shape: f32[8,128], index: 4, kind: output, shape index: {}]
  %s5 = sld [smem:[#allocation0]]
  $region69: #{tpu_custom_call.1} parent=0
    _
  %s7 = ssub.s32 1, %s5
  %s8 = scalar_select 0, %s7, %s5
  $region1: #{tpu_custom_call.1} parent=0
    #allocation4 [shape = 'u8[262144]{0}', space=vmem, size = 0x40000, scoped, tag = 'input window, operand 0']
    #allocation5 [shape = 's32[2]{0}', space=sflag, size = 0x8, scoped, tag = 'scoped memory for tpu_custom_call.1']
    #allocation6 [shape = 's32[2]{0}', space=sflag, size = 0x8, scoped, tag = 'scoped memory for tpu_custom_call.1']
    #allocation7 [shape = 'u8[131072]{0}', space=vmem, size = 0x20000, scoped, tag = 'input window, operand 1, single buffered']
    #allocation8 [shape = 's32[1]{0}', space=sflag, size = 0x4, scoped, tag = 'scoped memory for tpu_custom_call.1']
    #allocation9 [shape = 'u8[32768]{0}', space=vmem, size = 0x8000, scoped, tag = 'input window, operand 2, single buffered']
    #allocation10 [shape = 'u8[4096]{0}', space=vmem, size = 0x1000, scoped, tag = 'output window, operand 0, single buffered']
    %9 = vsyncpa [#allocation5], 0
    %s10 = scalar_lea.sflag [#allocation5], 1
    %11 = vsyncpa %s10, 0
    %12 = vsyncpa [#allocation8], 0
    %13 = vsyncpa [#allocation6], 0
    loop: start=0, step=1, limit=4
    $region2: #{tpu_custom_call.1} parent=1 // loop_pre_header
      _
    $region3: #{tpu_custom_call.1} parent=1 // loop_header
      %s15 = sphi 0, %s19
      %p16 = scmp.ge.s32.totalorder %s15, 4
      %s22 = sphi 0, %s34
      %s23 = sphi 0, %s30
      %s24 = sphi 0, %s22
      %s25 = sphi 0, %s23
      %s26 = sphi 0, %s24
      %s27 = sphi 0, %s25
      %s39 = sphi 0, %s41
      %s42 = sphi 0, %s39
      %s43 = sphi 0, %s42
      %s59 = sphi 0, %s43
      %s63 = sphi 0, %s63
      %s65 = sphi 0, %s63
      %s66 = sphi 0, %s65
      %s80 = sphi 0, %s66
      %s84 = sphi 0, %s84
      %s86 = sphi 0, %s84
      %s87 = sphi 0, %s86
      %s101 = sphi 0, %s87
      %s105 = sphi 0, %s105
      %s107 = sphi 0, %s105
      %s108 = sphi 0, %s107
      %s122 = sphi 0, %s108
      %s128 = sphi 0, %s130
      %s131 = sphi 0, %s128
      %s132 = sphi 0, %s131
      %s148 = sphi 0, %s132
    $region4: #{tpu_custom_call.1} parent=1 // loop_header_branch
      %18 = sbr.rel (%p16) target = $region8
    $region5: #{tpu_custom_call.1} parent=1 // loop_body
      %s20 = ssub.s32 %s15, 1
      %s21 = ssub.s32 %s15, 2
      %s28 = sadd.s32 1, %s23
      %p29 = scmp.ge.s32.totalorder %s28, 2
      %s30 = scalar_select %p29, 0, %s28
      %s31 = sadd.s32 1, %s22
      %s32 = scalar_select %p29, %s31, %s22
      %p33 = scmp.ge.s32.totalorder %s32, 1
      %s34 = scalar_select %p33, 0, %s32
      %s35 = ssub.s32 %s23, %s30
      %s36 = ssub.s32 %s22, %s34
      %s37 = sor.u32 %s35, %s36
      %p38 = scmp.eq.s32.totalorder %s37, 0
      %s40 = sadd.s32 %s39, 1
      %s41 = scalar_select %p38, %s39, %s40
      %p44 = pneg %p38
      %p45 = scmp.eq.s32.totalorder %s15, 1
      %p46 = por %p44, %p45
      %p47 = scmp.ne.s32.totalorder %s39, %s42
      %p48 = scmp.eq.s32.totalorder %s15, 0
      %p49 = por %p47, %p48
      %p50 = scmp.ne.s32.totalorder %s39, %s42
      %p51 = scmp.eq.s32.totalorder %s20, 1
      %p52 = por %p50, %p51
      %p53 = scmp.ne.s32.totalorder %s42, %s43
      %p54 = scmp.eq.s32.totalorder %s20, 0
      %p55 = por %p53, %p54
      %p56 = scmp.ne.s32.totalorder %s42, %s43
      %p57 = scmp.eq.s32.totalorder %s21, 1
      %p58 = por %p56, %p57
      %p60 = scmp.ne.s32.totalorder %s43, %s59
      %p61 = scmp.eq.s32.totalorder %s21, 0
      %p62 = por %p60, %p61
      %s64 = sadd.s32 %s63, 1
      %p67 = scmp.eq.s32.totalorder %s15, 1
      %p68 = scmp.ne.s32.totalorder %s63, %s65
      %p69 = scmp.eq.s32.totalorder %s15, 0
      %p70 = por %p68, %p69
      %p71 = scmp.ne.s32.totalorder %s63, %s65
      %p72 = scmp.eq.s32.totalorder %s20, 1
      %p73 = por %p71, %p72
      %p74 = scmp.ne.s32.totalorder %s65, %s66
      %p75 = scmp.eq.s32.totalorder %s20, 0
      %p76 = por %p74, %p75
      %p77 = scmp.ne.s32.totalorder %s65, %s66
      %p78 = scmp.eq.s32.totalorder %s21, 1
      %p79 = por %p77, %p78
      %p81 = scmp.ne.s32.totalorder %s66, %s80
      %p82 = scmp.eq.s32.totalorder %s21, 0
      %p83 = por %p81, %p82
      %s85 = sadd.s32 %s84, 1
      %p88 = scmp.eq.s32.totalorder %s15, 1
      %p89 = scmp.ne.s32.totalorder %s84, %s86
      %p90 = scmp.eq.s32.totalorder %s15, 0
      %p91 = por %p89, %p90
      %p92 = scmp.ne.s32.totalorder %s84, %s86
      %p93 = scmp.eq.s32.totalorder %s20, 1
      %p94 = por %p92, %p93
      %p95 = scmp.ne.s32.totalorder %s86, %s87
      %p96 = scmp.eq.s32.totalorder %s20, 0
      %p97 = por %p95, %p96
      %p98 = scmp.ne.s32.totalorder %s86, %s87
      %p99 = scmp.eq.s32.totalorder %s21, 1
      %p100 = por %p98, %p99
      %p102 = scmp.ne.s32.totalorder %s87, %s101
      %p103 = scmp.eq.s32.totalorder %s21, 0
      %p104 = por %p102, %p103
      %s106 = sadd.s32 %s105, 1
      %p109 = scmp.eq.s32.totalorder %s15, 1
      %p110 = scmp.ne.s32.totalorder %s105, %s107
      %p111 = scmp.eq.s32.totalorder %s15, 0
      %p112 = por %p110, %p111
      %p113 = scmp.ne.s32.totalorder %s105, %s107
      %p114 = scmp.eq.s32.totalorder %s20, 1
      %p115 = por %p113, %p114
      %p116 = scmp.ne.s32.totalorder %s107, %s108
      %p117 = scmp.eq.s32.totalorder %s20, 0
      %p118 = por %p116, %p117
      %p119 = scmp.ne.s32.totalorder %s107, %s108
      %p120 = scmp.eq.s32.totalorder %s21, 1
      %p121 = por %p119, %p120
      %p123 = scmp.ne.s32.totalorder %s108, %s122
      %p124 = scmp.eq.s32.totalorder %s21, 0
      %p125 = por %p123, %p124
      %s126 = ssub.s32 %s22, %s34
      %p127 = scmp.eq.s32.totalorder %s126, 0
      %s129 = sadd.s32 %s128, 1
      %s130 = scalar_select %p127, %s128, %s129
      %p133 = pneg %p127
      %p134 = scmp.eq.s32.totalorder %s15, 1
      %p135 = por %p133, %p134
      %p136 = scmp.ne.s32.totalorder %s128, %s131
      %p137 = scmp.eq.s32.totalorder %s15, 0
      %p138 = por %p136, %p137
      %p139 = scmp.ne.s32.totalorder %s128, %s131
      %p140 = scmp.eq.s32.totalorder %s20, 1
      %p141 = por %p139, %p140
      %p142 = scmp.ne.s32.totalorder %s131, %s132
      %p143 = scmp.eq.s32.totalorder %s20, 0
      %p144 = por %p142, %p143
      %p145 = scmp.ne.s32.totalorder %s131, %s132
      %p146 = scmp.eq.s32.totalorder %s21, 1
      %p147 = por %p145, %p146
      %p149 = scmp.ne.s32.totalorder %s132, %s148
      %p150 = scmp.eq.s32.totalorder %s21, 0
      %p151 = por %p149, %p150
      %p152 = scmp.le.s32.totalorder 1, %s15
      %p153 = scmp.lt.s32.totalorder %s15, 3
      %p154 = pnand %p152, %p153
      %p155 = pneg %p154
      // Predicated region
      $region9: #{tpu_custom_call.1} parent=5 // pred_check
        _
      $region10: #{tpu_custom_call.1} parent=5 // pred_check_branch
        %157 = sbr.rel (%p154) target = $region12
      $region11: #{tpu_custom_call.1} parent=5 // pred_region
        %s158 = ssub.s32 %s15, 1
        // Predicated region
        $region13: #{tpu_custom_call.1} parent=11 // pred_check
          %p159 = pneg %p76
        $region14: #{tpu_custom_call.1} parent=11 // pred_check_branch
          %161 = sbr.rel (%p159) target = $region16
        $region15: #{tpu_custom_call.1} parent=11 // pred_region
          %s163 = ssub.s32 4096, 4096
          %164 = vsyncadd [#allocation8], %s163
          %s165 = sshll.u32 [#allocation7], 4
          %s166 = int_to_ptr.vmem [resolvable:$true] %s165
          %171 = dma.hbm_to_vmem [thread:$0]  %s1, 4096, %s166, [#allocation8], 256, 256, 16
        $region16: #{tpu_custom_call.1} parent=11 // pred_fallthru
          _
        // Predicated region
        $region17: #{tpu_custom_call.1} parent=11 // pred_check
          %p172 = pneg %p97
        $region18: #{tpu_custom_call.1} parent=11 // pred_check_branch
          %174 = sbr.rel (%p172) target = $region20
        $region19: #{tpu_custom_call.1} parent=11 // pred_region
          %s176 = ssub.s32 1024, 1024
          %177 = vsyncadd [#allocation8], %s176
          %s178 = sshll.u32 [#allocation9], 4
          %s179 = int_to_ptr.vmem [resolvable:$true] %s178
          %184 = dma.hbm_to_vmem [thread:$0]  %s2, 1024, %s179, [#allocation8], 64, 64, 4
        $region20: #{tpu_custom_call.1} parent=11 // pred_fallthru
          _
        // Predicated region
        $region21: #{tpu_custom_call.1} parent=11 // pred_check
          %p185 = pneg %p118
        $region22: #{tpu_custom_call.1} parent=11 // pred_check_branch
          %187 = sbr.rel (%p185) target = $region24
        $region23: #{tpu_custom_call.1} parent=11 // pred_region
          _
        $region24: #{tpu_custom_call.1} parent=11 // pred_fallthru
          _
      $region12: #{tpu_custom_call.1} parent=5 // pred_fallthru
        _
      %p188 = scmp.lt.s32.totalorder %s15, 2
      // Predicated region
      $region25: #{tpu_custom_call.1} parent=5 // pred_check
        %p189 = pneg %p188
      $region26: #{tpu_custom_call.1} parent=5 // pred_check_branch
        %191 = sbr.rel (%p189) target = $region28
      $region27: #{tpu_custom_call.1} parent=5 // pred_region
        // Predicated region
        $region29: #{tpu_custom_call.1} parent=27 // pred_check
          %p192 = pneg %p49
        $region30: #{tpu_custom_call.1} parent=27 // pred_check_branch
          %194 = sbr.rel (%p192) target = $region32
        $region31: #{tpu_custom_call.1} parent=27 // pred_region
          %s195 = sand.u32 %s39, 1
          %s196 = scalar_lea.sflag [#allocation5], %s195
          %s197 = sand.u32 %s39, 1
          %s198 = smul.addr %s197, 256
          %s199 = scalar_lea.vmem [#allocation4], %s198
          %s200 = smul.u32 8, %s23
          %s202 = ssub.s32 4096, 4096
          %203 = vsyncadd %s196, %s202
          %s204 = smul.addr %s22, 4
          %s205 = smul.addr %s200, 4
          %s206 = sadd.s32 %s204, %s205
          %s207 = smul.addr %s206, 128
          %s208 = scalar_lea.hbm %s0, %s207
          %s209 = sshll.u32 %s199, 4
          %s210 = int_to_ptr.vmem [resolvable:$true] %s209
          %215 = dma.hbm_to_vmem [thread:$0]  %s208, 4096, %s210, %s196, 512, 512, 32
        $region32: #{tpu_custom_call.1} parent=27 // pred_fallthru
          _
      $region28: #{tpu_custom_call.1} parent=5 // pred_fallthru
        _
      %p216 = scmp.le.s32.totalorder 1, %s15
      %p217 = scmp.lt.s32.totalorder %s15, 3
      %p218 = pnand %p216, %p217
      %p219 = pneg %p218
      // Predicated region
      $region33: #{tpu_custom_call.1} parent=5 // pred_check
        _
      $region34: #{tpu_custom_call.1} parent=5 // pred_check_branch
        %221 = sbr.rel (%p218) target = $region36
      $region35: #{tpu_custom_call.1} parent=5 // pred_region
        %s222 = ssub.s32 %s15, 1
        %s223 = sand.u32 %s42, 1
        %s224 = scalar_lea.sflag [#allocation5], %s223
        %s225 = sand.u32 %s42, 1
        %s226 = smul.addr %s225, 256
        %s227 = scalar_lea.vmem [#allocation4], %s226
        // Predicated region
        $region37: #{tpu_custom_call.1} parent=35 // pred_check
          %p228 = pneg %p55
        $region38: #{tpu_custom_call.1} parent=35 // pred_check_branch
          %230 = sbr.rel (%p228) target = $region40
        $region39: #{tpu_custom_call.1} parent=35 // pred_region
          %231 = dma.done %s224, 4096
        $region40: #{tpu_custom_call.1} parent=35 // pred_fallthru
          _
        // Predicated region
        $region41: #{tpu_custom_call.1} parent=35 // pred_check
          %p232 = pneg %p76
        $region42: #{tpu_custom_call.1} parent=35 // pred_check_branch
          %234 = sbr.rel (%p232) target = $region44
        $region43: #{tpu_custom_call.1} parent=35 // pred_region
          %235 = dma.done [#allocation8], 4096
        $region44: #{tpu_custom_call.1} parent=35 // pred_fallthru
          _
        // Predicated region
        $region45: #{tpu_custom_call.1} parent=35 // pred_check
          %p236 = pneg %p97
        $region46: #{tpu_custom_call.1} parent=35 // pred_check_branch
          %238 = sbr.rel (%p236) target = $region48
        $region47: #{tpu_custom_call.1} parent=35 // pred_region
          %239 = dma.done [#allocation8], 1024
        $region48: #{tpu_custom_call.1} parent=35 // pred_fallthru
          _
        %s240 = sand.u32 %s42, 1
        %s241 = scalar_lea.sflag [#allocation5], %s240
        %s242 = sand.u32 %s42, 1
        %s243 = smul.addr %s242, 256
        %s244 = scalar_lea.vmem [#allocation4], %s243
        %p245 = pneg %p55
        %p246 = pneg %p52
        %p247 = pneg %p76
        %p248 = pneg %p73
        %p249 = pneg %p97
        %p250 = pneg %p94
        %p251 = pneg %p118
        %p252 = pneg %p115
        %p253 = pneg %p144
        %p254 = pneg %p141
        %s255 = smul.u32 8, %s25
        %p257 = scmp.eq.s32.totalorder %s25, 0
        // Predicated region
        $region49: #{tpu_custom_call.1} parent=35 // pred_check
          %p258 = pneg %p257
        $region50: #{tpu_custom_call.1} parent=35 // pred_check_branch
          %260 = sbr.rel (%p258) target = $region52
        $region51: #{tpu_custom_call.1} parent=35 // pred_region
          %261 = vst [vmem:[#allocation2] sm:$0xff] 0.0
          %262 = vst [vmem:[#allocation3] sm:$0xff] 0.0
        $region52: #{tpu_custom_call.1} parent=35 // pred_fallthru
          _
        %v263 = vld [vmem:[#allocation7] sm:$0xff]
        %v264 = vld [vmem:[#allocation7 + $0x8] sm:$0xff]
        %v265 = vld [vmem:[#allocation7 + $0x10] sm:$0xff]
        %v266 = vld [vmem:[#allocation7 + $0x18] sm:$0xff]
        %v267 = vld [vmem:[#allocation7 + $0x20] sm:$0xff]
        %v268 = vld [vmem:[#allocation7 + $0x28] sm:$0xff]
        %v269 = vld [vmem:[#allocation7 + $0x30] sm:$0xff]
        %v270 = vld [vmem:[#allocation7 + $0x38] sm:$0xff]
        %v271 = vld [vmem:[#allocation7 + $0x40] sm:$0xff]
        %v272 = vld [vmem:[#allocation7 + $0x48] sm:$0xff]
        %v273 = vld [vmem:[#allocation7 + $0x50] sm:$0xff]
        %v274 = vld [vmem:[#allocation7 + $0x58] sm:$0xff]
        %v275 = vld [vmem:[#allocation7 + $0x60] sm:$0xff]
        %v276 = vld [vmem:[#allocation7 + $0x68] sm:$0xff]
        %v277 = vld [vmem:[#allocation7 + $0x70] sm:$0xff]
        %v278 = vld [vmem:[#allocation7 + $0x78] sm:$0xff]
        %v279 = vld [vmem:[#allocation7 + $0x80] sm:$0xff]
        %v280 = vld [vmem:[#allocation7 + $0x88] sm:$0xff]
        %v281 = vld [vmem:[#allocation7 + $0x90] sm:$0xff]
        %v282 = vld [vmem:[#allocation7 + $0x98] sm:$0xff]
        %v283 = vld [vmem:[#allocation7 + $0xa0] sm:$0xff]
        %v284 = vld [vmem:[#allocation7 + $0xa8] sm:$0xff]
        %v285 = vld [vmem:[#allocation7 + $0xb0] sm:$0xff]
        %v286 = vld [vmem:[#allocation7 + $0xb8] sm:$0xff]
        %v287 = vld [vmem:[#allocation7 + $0xc0] sm:$0xff]
        %v288 = vld [vmem:[#allocation7 + $0xc8] sm:$0xff]
        %v289 = vld [vmem:[#allocation7 + $0xd0] sm:$0xff]
        %v290 = vld [vmem:[#allocation7 + $0xd8] sm:$0xff]
        %v291 = vld [vmem:[#allocation7 + $0xe0] sm:$0xff]
        %v292 = vld [vmem:[#allocation7 + $0xe8] sm:$0xff]
        %v293 = vld [vmem:[#allocation7 + $0xf0] sm:$0xff]
        %v294 = vld [vmem:[#allocation7 + $0xf8] sm:$0xff]
        %v295 = vld [vmem:[#allocation2] sm:$0xff]
        %v296 = vld [vmem:[#allocation3] sm:$0xff]
        %v297 = vld [vmem:[%s227] sm:$0xff]
        %v298 = vld [vmem:[%s227 + $0x8] sm:$0xff]
        %v299 = vld [vmem:[%s227 + $0x10] sm:$0xff]
        %v300 = vld [vmem:[%s227 + $0x18] sm:$0xff]
        %v301 = vpack.c.bf16 %v295, %v295
        %v334 = vunpack.c.l.b16 %v263
        %v335 = vunpack.c.h.b16 %v263
        %v336 = vunpack.c.l.b16 %v264
        %v337 = vunpack.c.h.b16 %v264
        %v338 = vunpack.c.l.b16 %v265
        %v339 = vunpack.c.h.b16 %v265
        %v340 = vunpack.c.l.b16 %v266
        %v341 = vunpack.c.h.b16 %v266
        %v342 = vunpack.c.l.b16 %v267
        %v343 = vunpack.c.h.b16 %v267
        %v344 = vunpack.c.l.b16 %v268
        %v345 = vunpack.c.h.b16 %v268
        %v346 = vunpack.c.l.b16 %v269
        %v347 = vunpack.c.h.b16 %v269
        %v348 = vunpack.c.l.b16 %v270
        %v349 = vunpack.c.h.b16 %v270
        %v350 = vunpack.c.l.b16 %v271
        %v351 = vunpack.c.h.b16 %v271
        %v352 = vunpack.c.l.b16 %v272
        %v353 = vunpack.c.h.b16 %v272
        %v354 = vunpack.c.l.b16 %v273
        %v355 = vunpack.c.h.b16 %v273
        %v356 = vunpack.c.l.b16 %v274
        %v357 = vunpack.c.h.b16 %v274
        %v358 = vunpack.c.l.b16 %v275
        %v359 = vunpack.c.h.b16 %v275
        %v360 = vunpack.c.l.b16 %v276
        %v361 = vunpack.c.h.b16 %v276
        %v362 = vunpack.c.l.b16 %v277
        %v363 = vunpack.c.h.b16 %v277
        %v364 = vunpack.c.l.b16 %v278
        %v365 = vunpack.c.h.b16 %v278
        %v366 = vunpack.c.l.b16 %v279
        %v367 = vunpack.c.h.b16 %v279
        %v368 = vunpack.c.l.b16 %v280
        %v369 = vunpack.c.h.b16 %v280
        %v370 = vunpack.c.l.b16 %v281
        %v371 = vunpack.c.h.b16 %v281
        %v372 = vunpack.c.l.b16 %v282
        %v373 = vunpack.c.h.b16 %v282
        %v374 = vunpack.c.l.b16 %v283
        %v375 = vunpack.c.h.b16 %v283
        %v376 = vunpack.c.l.b16 %v284
        %v377 = vunpack.c.h.b16 %v284
        %v378 = vunpack.c.l.b16 %v285
        %v379 = vunpack.c.h.b16 %v285
        %v380 = vunpack.c.l.b16 %v286
        %v381 = vunpack.c.h.b16 %v286
        %v382 = vunpack.c.l.b16 %v287
        %v383 = vunpack.c.h.b16 %v287
        %v384 = vunpack.c.l.b16 %v288
        %v385 = vunpack.c.h.b16 %v288
        %v386 = vunpack.c.l.b16 %v289
        %v387 = vunpack.c.h.b16 %v289
        %v388 = vunpack.c.l.b16 %v290
        %v389 = vunpack.c.h.b16 %v290
        %v390 = vunpack.c.l.b16 %v291
        %v391 = vunpack.c.h.b16 %v291
        %v392 = vunpack.c.l.b16 %v292
        %v393 = vunpack.c.h.b16 %v292
        %v394 = vunpack.c.l.b16 %v293
        %v395 = vunpack.c.h.b16 %v293
        %v396 = vunpack.c.l.b16 %v294
        %v397 = vunpack.c.h.b16 %v294
        %v398 = vpack.c.b16 %v338, %v334
        %v399 = vpack.c.b16 %v339, %v335
        %v400 = vpack.c.b16 %v340, %v336
        %v401 = vpack.c.b16 %v341, %v337
        %v402 = vpack.c.b16 %v346, %v342
        %v403 = vpack.c.b16 %v347, %v343
        %v404 = vpack.c.b16 %v348, %v344
        %v405 = vpack.c.b16 %v349, %v345
        %v406 = vpack.c.b16 %v354, %v350
        %v407 = vpack.c.b16 %v355, %v351
        %v408 = vpack.c.b16 %v356, %v352
        %v409 = vpack.c.b16 %v357, %v353
        %v410 = vpack.c.b16 %v362, %v358
        %v411 = vpack.c.b16 %v363, %v359
        %v412 = vpack.c.b16 %v364, %v360
        %v413 = vpack.c.b16 %v365, %v361
        %v414 = vpack.c.b16 %v370, %v366
        %v415 = vpack.c.b16 %v371, %v367
        %v416 = vpack.c.b16 %v372, %v368
        %v417 = vpack.c.b16 %v373, %v369
        %v418 = vpack.c.b16 %v378, %v374
        %v419 = vpack.c.b16 %v379, %v375
        %v420 = vpack.c.b16 %v380, %v376
        %v421 = vpack.c.b16 %v381, %v377
        %v422 = vpack.c.b16 %v386, %v382
        %v423 = vpack.c.b16 %v387, %v383
        %v424 = vpack.c.b16 %v388, %v384
        %v425 = vpack.c.b16 %v389, %v385
        %v426 = vpack.c.b16 %v394, %v390
        %v427 = vpack.c.b16 %v395, %v391
        %v428 = vpack.c.b16 %v396, %v392
        %v429 = vpack.c.b16 %v397, %v393
        %462 = vmatprep.subr.bf16.mxu0 %v399
        %463 = vmatpush1.bf16.msra.mxu0 %v398
        %464 = vmatprep.subr.bf16.mxu0 %v403
        %465 = vmatpush1.bf16.msra.mxu0 %v402
        %466 = vmatprep.subr.bf16.mxu0 %v407
        %467 = vmatpush1.bf16.msra.mxu0 %v406
        %468 = vmatprep.subr.bf16.mxu0 %v411
        %469 = vmatpush1.bf16.msra.mxu0 %v410
        %470 = vmatprep.subr.bf16.mxu0 %v415
        %471 = vmatpush1.bf16.msra.mxu0 %v414
        %472 = vmatprep.subr.bf16.mxu0 %v419
        %473 = vmatpush1.bf16.msra.mxu0 %v418
        %474 = vmatprep.subr.bf16.mxu0 %v423
        %475 = vmatpush1.bf16.msra.mxu0 %v422
        %476 = vmatprep.subr.bf16.mxu0 %v427
        %477 = vmatpush1.bf16.msra.mxu0 %v426
        %478 = vmatprep.subr.bf16.mxu0 0
        %479 = vmatpush1.bf16.msra.mxu0 0
        %480 = vmatprep.subr.bf16.mxu0 0
        %481 = vmatpush1.bf16.msra.mxu0 0
        %482 = vmatprep.subr.bf16.mxu0 0
        %483 = vmatpush1.bf16.msra.mxu0 0
        %484 = vmatprep.subr.bf16.mxu0 0
        %485 = vmatpush1.bf16.msra.mxu0 0
        %486 = vmatprep.subr.bf16.mxu0 0
        %487 = vmatpush1.bf16.msra.mxu0 0
        %488 = vmatprep.subr.bf16.mxu0 0
        %489 = vmatpush1.bf16.msra.mxu0 0
        %490 = vmatprep.subr.bf16.mxu0 0
        %491 = vmatpush1.bf16.msra.mxu0 0
        %492 = vmatprep.subr.bf16.mxu0 0
        %493 = vmatpush1.bf16.msra.mxu0 0
        %494 = vmatprep.mubr.bf16.mxu0 0
        %495 = vmatmul.mubr.bf16.gmra.mrb[0].mxu0 %v301
        %v496 = vpop.f32.mrb[0].mxu0
        %v497 = vadd.f32 0.0, %v496
        %v498 = vpop.f32.mrb[0].mxu0
        %v499 = vadd.f32 0.0, %v498
        %v500 = vpop.f32.mrb[0].mxu0
        %v501 = vpop.f32.mrb[0].mxu0
        %502 = vdwg.mxu0
        %503 = vmatprep.subr.bf16.mxu0 %v401
        %504 = vmatpush1.bf16.msra.mxu0 %v400
        %505 = vmatprep.subr.bf16.mxu0 %v405
        %506 = vmatpush1.bf16.msra.mxu0 %v404
        %507 = vmatprep.subr.bf16.mxu0 %v409
        %508 = vmatpush1.bf16.msra.mxu0 %v408
        %509 = vmatprep.subr.bf16.mxu0 %v413
        %510 = vmatpush1.bf16.msra.mxu0 %v412
        %511 = vmatprep.subr.bf16.mxu0 %v417
        %512 = vmatpush1.bf16.msra.mxu0 %v416
        %513 = vmatprep.subr.bf16.mxu0 %v421
        %514 = vmatpush1.bf16.msra.mxu0 %v420
        %515 = vmatprep.subr.bf16.mxu0 %v425
        %516 = vmatpush1.bf16.msra.mxu0 %v424
        %517 = vmatprep.subr.bf16.mxu0 %v429
        %518 = vmatpush1.bf16.msra.mxu0 %v428
        %519 = vmatprep.subr.bf16.mxu0 0
        %520 = vmatpush1.bf16.msra.mxu0 0
        %521 = vmatprep.subr.bf16.mxu0 0
        %522 = vmatpush1.bf16.msra.mxu0 0
        %523 = vmatprep.subr.bf16.mxu0 0
        %524 = vmatpush1.bf16.msra.mxu0 0
        %525 = vmatprep.subr.bf16.mxu0 0
        %526 = vmatpush1.bf16.msra.mxu0 0
        %527 = vmatprep.subr.bf16.mxu0 0
        %528 = vmatpush1.bf16.msra.mxu0 0
        %529 = vmatprep.subr.bf16.mxu0 0
        %530 = vmatpush1.bf16.msra.mxu0 0
        %531 = vmatprep.subr.bf16.mxu0 0
        %532 = vmatpush1.bf16.msra.mxu0 0
        %533 = vmatprep.subr.bf16.mxu0 0
        %534 = vmatpush1.bf16.msra.mxu0 0
        %535 = vmatprep.mubr.bf16.mxu0 0
        %536 = vmatmul.mubr.bf16.gmra.mrb[0].mxu0 %v301
        %v537 = vpop.f32.mrb[0].mxu0
        %v538 = vadd.f32 0.0, %v537
        %v539 = vpop.f32.mrb[0].mxu0
        %v540 = vadd.f32 0.0, %v539
        %v541 = vpop.f32.mrb[0].mxu0
        %v542 = vpop.f32.mrb[0].mxu0
        %543 = vdwg.mxu0
        %v544 = vadd.f32 %v297, %v497
        %v545 = vadd.f32 %v298, %v499
        %v546 = vadd.f32 %v299, %v538
        %v547 = vadd.f32 %v300, %v540
        %v548 = vxor.u32 %v544, 2147483648
        %v549 = vmul.f32 %v548, 1.442695
        %v550 = vpow.pop %v549
        %v551 = vadd.f32 %v550, 1.0
        %v552 = vrcp.pop %v551
        %v553 = vmul.f32 1.0, %v552
        %v554 = vxor.u32 %v545, 2147483648
        %v555 = vmul.f32 %v554, 1.442695
        %v556 = vpow.pop %v555
        %v557 = vadd.f32 %v556, 1.0
        %v558 = vrcp.pop %v557
        %v559 = vmul.f32 1.0, %v558
        %v560 = vtanh.pop %v546
        %v561 = vxor.u32 %v547, 2147483648
        %v562 = vmul.f32 %v561, 1.442695
        %v563 = vpow.pop %v562
        %v564 = vadd.f32 %v563, 1.0
        %v565 = vrcp.pop %v564
        %v566 = vmul.f32 1.0, %v565
        %v567 = vmul.f32 %v559, %v296
        %v568 = vmul.f32 %v553, %v560
        %v569 = vadd.f32 %v567, %v568
        %v570 = vtanh.pop %v569
        %v571 = vmul.f32 %v566, %v570
        %s572 = scalar_lea.vmem %s227, 32 [#allocation4]
        %v573 = vld [vmem:[%s572] sm:$0xff]
        %v574 = vld [vmem:[%s572 + $0x8] sm:$0xff]
        %v575 = vld [vmem:[%s572 + $0x10] sm:$0xff]
        %v576 = vld [vmem:[%s572 + $0x18] sm:$0xff]
        %v577 = vpack.c.bf16 %v571, %v571
        %578 = vmatprep.subr.bf16.mxu0 %v399
        %579 = vmatpush1.bf16.msra.mxu0 %v398
        %580 = vmatprep.subr.bf16.mxu0 %v403
        %581 = vmatpush1.bf16.msra.mxu0 %v402
        %582 = vmatprep.subr.bf16.mxu0 %v407
        %583 = vmatpush1.bf16.msra.mxu0 %v406
        %584 = vmatprep.subr.bf16.mxu0 %v411
        %585 = vmatpush1.bf16.msra.mxu0 %v410
        %586 = vmatprep.subr.bf16.mxu0 %v415
        %587 = vmatpush1.bf16.msra.mxu0 %v414
        %588 = vmatprep.subr.bf16.mxu0 %v419
        %589 = vmatpush1.bf16.msra.mxu0 %v418
        %590 = vmatprep.subr.bf16.mxu0 %v423
        %591 = vmatpush1.bf16.msra.mxu0 %v422
        %592 = vmatprep.subr.bf16.mxu0 %v427
        %593 = vmatpush1.bf16.msra.mxu0 %v426
        %594 = vmatprep.subr.bf16.mxu0 0
        %595 = vmatpush1.bf16.msra.mxu0 0
        %596 = vmatprep.subr.bf16.mxu0 0
        %597 = vmatpush1.bf16.msra.mxu0 0
        %598 = vmatprep.subr.bf16.mxu0 0
        %599 = vmatpush1.bf16.msra.mxu0 0
        %600 = vmatprep.subr.bf16.mxu0 0
        %601 = vmatpush1.bf16.msra.mxu0 0
        %602 = vmatprep.subr.bf16.mxu0 0
        %603 = vmatpush1.bf16.msra.mxu0 0
        %604 = vmatprep.subr.bf16.mxu0 0
        %605 = vmatpush1.bf16.msra.mxu0 0
        %606 = vmatprep.subr.bf16.mxu0 0
        %607 = vmatpush1.bf16.msra.mxu0 0
        %608 = vmatprep.subr.bf16.mxu0 0
        %609 = vmatpush1.bf16.msra.mxu0 0
        %610 = vmatprep.mubr.bf16.mxu0 0
        %611 = vmatmul.mubr.bf16.gmra.mrb[0].mxu0 %v577
        %v612 = vpop.f32.mrb[0].mxu0
        %v613 = vadd.f32 0.0, %v612
        %v614 = vpop.f32.mrb[0].mxu0
        %v615 = vadd.f32 0.0, %v614
        %v616 = vpop.f32.mrb[0].mxu0
        %v617 = vpop.f32.mrb[0].mxu0
        %618 = vdwg.mxu0
        %619 = vmatprep.subr.bf16.mxu0 %v401
        %620 = vmatpush1.bf16.msra.mxu0 %v400
        %621 = vmatprep.subr.bf16.mxu0 %v405
        %622 = vmatpush1.bf16.msra.mxu0 %v404
        %623 = vmatprep.subr.bf16.mxu0 %v409
        %624 = vmatpush1.bf16.msra.mxu0 %v408
        %625 = vmatprep.subr.bf16.mxu0 %v413
        %626 = vmatpush1.bf16.msra.mxu0 %v412
        %627 = vmatprep.subr.bf16.mxu0 %v417
        %628 = vmatpush1.bf16.msra.mxu0 %v416
        %629 = vmatprep.subr.bf16.mxu0 %v421
        %630 = vmatpush1.bf16.msra.mxu0 %v420
        %631 = vmatprep.subr.bf16.mxu0 %v425
        %632 = vmatpush1.bf16.msra.mxu0 %v424
        %633 = vmatprep.subr.bf16.mxu0 %v429
        %634 = vmatpush1.bf16.msra.mxu0 %v428
        %635 = vmatprep.subr.bf16.mxu0 0
        %636 = vmatpush1.bf16.msra.mxu0 0
        %637 = vmatprep.subr.bf16.mxu0 0
        %638 = vmatpush1.bf16.msra.mxu0 0
        %639 = vmatprep.subr.bf16.mxu0 0
        %640 = vmatpush1.bf16.msra.mxu0 0
        %641 = vmatprep.subr.bf16.mxu0 0
        %642 = vmatpush1.bf16.msra.mxu0 0
        %643 = vmatprep.subr.bf16.mxu0 0
        %644 = vmatpush1.bf16.msra.mxu0 0
        %645 = vmatprep.subr.bf16.mxu0 0
        %646 = vmatpush1.bf16.msra.mxu0 0
        %647 = vmatprep.subr.bf16.mxu0 0
        %648 = vmatpush1.bf16.msra.mxu0 0
        %649 = vmatprep.subr.bf16.mxu0 0
        %650 = vmatpush1.bf16.msra.mxu0 0
        %651 = vmatprep.mubr.bf16.mxu0 0
        %652 = vmatmul.mubr.bf16.gmra.mrb[0].mxu0 %v577
        %v653 = vpop.f32.mrb[0].mxu0
        %v654 = vadd.f32 0.0, %v653
        %v655 = vpop.f32.mrb[0].mxu0
        %v656 = vadd.f32 0.0, %v655
        %v657 = vpop.f32.mrb[0].mxu0
        %v658 = vpop.f32.mrb[0].mxu0
        %659 = vdwg.mxu0
        %v660 = vadd.f32 %v573, %v613
        %v661 = vadd.f32 %v574, %v615
        %v662 = vadd.f32 %v575, %v654
        %v663 = vadd.f32 %v576, %v656
        %v664 = vxor.u32 %v660, 2147483648
        %v665 = vmul.f32 %v664, 1.442695
        %v666 = vpow.pop %v665
        %v667 = vadd.f32 %v666, 1.0
        %v668 = vrcp.pop %v667
        %v669 = vmul.f32 1.0, %v668
        %v670 = vxor.u32 %v661, 2147483648
        %v671 = vmul.f32 %v670, 1.442695
        %v672 = vpow.pop %v671
        %v673 = vadd.f32 %v672, 1.0
        %v674 = vrcp.pop %v673
        %v675 = vmul.f32 1.0, %v674
        %v676 = vtanh.pop %v662
        %v677 = vxor.u32 %v663, 2147483648
        %v678 = vmul.f32 %v677, 1.442695
        %v679 = vpow.pop %v678
        %v680 = vadd.f32 %v679, 1.0
        %v681 = vrcp.pop %v680
        %v682 = vmul.f32 1.0, %v681
        %v683 = vmul.f32 %v675, %v569
        %v684 = vmul.f32 %v669, %v676
        %v685 = vadd.f32 %v683, %v684
        %v686 = vtanh.pop %v685
        %v687 = vmul.f32 %v682, %v686
        %s688 = scalar_lea.vmem %s227, 64 [#allocation4]
        %v689 = vld [vmem:[%s688] sm:$0xff]
        %v690 = vld [vmem:[%s688 + $0x8] sm:$0xff]
        %v691 = vld [vmem:[%s688 + $0x10] sm:$0xff]
        %v692 = vld [vmem:[%s688 + $0x18] sm:$0xff]
        %v693 = vpack.c.bf16 %v687, %v687
        %694 = vmatprep.subr.bf16.mxu0 %v399
        %695 = vmatpush1.bf16.msra.mxu0 %v398
        %696 = vmatprep.subr.bf16.mxu0 %v403
        %697 = vmatpush1.bf16.msra.mxu0 %v402
        %698 = vmatprep.subr.bf16.mxu0 %v407
        %699 = vmatpush1.bf16.msra.mxu0 %v406
        %700 = vmatprep.subr.bf16.mxu0 %v411
        %701 = vmatpush1.bf16.msra.mxu0 %v410
        %702 = vmatprep.subr.bf16.mxu0 %v415
        %703 = vmatpush1.bf16.msra.mxu0 %v414
        %704 = vmatprep.subr.bf16.mxu0 %v419
        %705 = vmatpush1.bf16.msra.mxu0 %v418
        %706 = vmatprep.subr.bf16.mxu0 %v423
        %707 = vmatpush1.bf16.msra.mxu0 %v422
        %708 = vmatprep.subr.bf16.mxu0 %v427
        %709 = vmatpush1.bf16.msra.mxu0 %v426
        %710 = vmatprep.subr.bf16.mxu0 0
        %711 = vmatpush1.bf16.msra.mxu0 0
        %712 = vmatprep.subr.bf16.mxu0 0
        %713 = vmatpush1.bf16.msra.mxu0 0
        %714 = vmatprep.subr.bf16.mxu0 0
        %715 = vmatpush1.bf16.msra.mxu0 0
        %716 = vmatprep.subr.bf16.mxu0 0
        %717 = vmatpush1.bf16.msra.mxu0 0
        %718 = vmatprep.subr.bf16.mxu0 0
        %719 = vmatpush1.bf16.msra.mxu0 0
        %720 = vmatprep.subr.bf16.mxu0 0
        %721 = vmatpush1.bf16.msra.mxu0 0
        %722 = vmatprep.subr.bf16.mxu0 0
        %723 = vmatpush1.bf16.msra.mxu0 0
        %724 = vmatprep.subr.bf16.mxu0 0
        %725 = vmatpush1.bf16.msra.mxu0 0
        %726 = vmatprep.mubr.bf16.mxu0 0
        %727 = vmatmul.mubr.bf16.gmra.mrb[0].mxu0 %v693
        %v728 = vpop.f32.mrb[0].mxu0
        %v729 = vadd.f32 0.0, %v728
        %v730 = vpop.f32.mrb[0].mxu0
        %v731 = vadd.f32 0.0, %v730
        %v732 = vpop.f32.mrb[0].mxu0
        %v733 = vpop.f32.mrb[0].mxu0
        %734 = vdwg.mxu0
        %735 = vmatprep.subr.bf16.mxu0 %v401
        %736 = vmatpush1.bf16.msra.mxu0 %v400
        %737 = vmatprep.subr.bf16.mxu0 %v405
        %738 = vmatpush1.bf16.msra.mxu0 %v404
        %739 = vmatprep.subr.bf16.mxu0 %v409
        %740 = vmatpush1.bf16.msra.mxu0 %v408
        %741 = vmatprep.subr.bf16.mxu0 %v413
        %742 = vmatpush1.bf16.msra.mxu0 %v412
        %743 = vmatprep.subr.bf16.mxu0 %v417
        %744 = vmatpush1.bf16.msra.mxu0 %v416
        %745 = vmatprep.subr.bf16.mxu0 %v421
        %746 = vmatpush1.bf16.msra.mxu0 %v420
        %747 = vmatprep.subr.bf16.mxu0 %v425
        %748 = vmatpush1.bf16.msra.mxu0 %v424
        %749 = vmatprep.subr.bf16.mxu0 %v429
        %750 = vmatpush1.bf16.msra.mxu0 %v428
        %751 = vmatprep.subr.bf16.mxu0 0
        %752 = vmatpush1.bf16.msra.mxu0 0
        %753 = vmatprep.subr.bf16.mxu0 0
        %754 = vmatpush1.bf16.msra.mxu0 0
        %755 = vmatprep.subr.bf16.mxu0 0
        %756 = vmatpush1.bf16.msra.mxu0 0
        %757 = vmatprep.subr.bf16.mxu0 0
        %758 = vmatpush1.bf16.msra.mxu0 0
        %759 = vmatprep.subr.bf16.mxu0 0
        %760 = vmatpush1.bf16.msra.mxu0 0
        %761 = vmatprep.subr.bf16.mxu0 0
        %762 = vmatpush1.bf16.msra.mxu0 0
        %763 = vmatprep.subr.bf16.mxu0 0
        %764 = vmatpush1.bf16.msra.mxu0 0
        %765 = vmatprep.subr.bf16.mxu0 0
        %766 = vmatpush1.bf16.msra.mxu0 0
        %767 = vmatprep.mubr.bf16.mxu0 0
        %768 = vmatmul.mubr.bf16.gmra.mrb[0].mxu0 %v693
        %v769 = vpop.f32.mrb[0].mxu0
        %v770 = vadd.f32 0.0, %v769
        %v771 = vpop.f32.mrb[0].mxu0
        %v772 = vadd.f32 0.0, %v771
        %v773 = vpop.f32.mrb[0].mxu0
        %v774 = vpop.f32.mrb[0].mxu0
        %775 = vdwg.mxu0
        %v776 = vadd.f32 %v689, %v729
        %v777 = vadd.f32 %v690, %v731
        %v778 = vadd.f32 %v691, %v770
        %v779 = vadd.f32 %v692, %v772
        %v780 = vxor.u32 %v776, 2147483648
        %v781 = vmul.f32 %v780, 1.442695
        %v782 = vpow.pop %v781
        %v783 = vadd.f32 %v782, 1.0
        %v784 = vrcp.pop %v783
        %v785 = vmul.f32 1.0, %v784
        %v786 = vxor.u32 %v777, 2147483648
        %v787 = vmul.f32 %v786, 1.442695
        %v788 = vpow.pop %v787
        %v789 = vadd.f32 %v788, 1.0
        %v790 = vrcp.pop %v789
        %v791 = vmul.f32 1.0, %v790
        %v792 = vtanh.pop %v778
        %v793 = vxor.u32 %v779, 2147483648
        %v794 = vmul.f32 %v793, 1.442695
        %v795 = vpow.pop %v794
        %v796 = vadd.f32 %v795, 1.0
        %v797 = vrcp.pop %v796
        %v798 = vmul.f32 1.0, %v797
        %v799 = vmul.f32 %v791, %v685
        %v800 = vmul.f32 %v785, %v792
        %v801 = vadd.f32 %v799, %v800
        %v802 = vtanh.pop %v801
        %v803 = vmul.f32 %v798, %v802
        %s804 = scalar_lea.vmem %s227, 96 [#allocation4]
        %v805 = vld [vmem:[%s804] sm:$0xff]
        %v806 = vld [vmem:[%s804 + $0x8] sm:$0xff]
        %v807 = vld [vmem:[%s804 + $0x10] sm:$0xff]
        %v808 = vld [vmem:[%s804 + $0x18] sm:$0xff]
        %v809 = vpack.c.bf16 %v803, %v803
        %810 = vmatprep.subr.bf16.mxu0 %v399
        %811 = vmatpush1.bf16.msra.mxu0 %v398
        %812 = vmatprep.subr.bf16.mxu0 %v403
        %813 = vmatpush1.bf16.msra.mxu0 %v402
        %814 = vmatprep.subr.bf16.mxu0 %v407
        %815 = vmatpush1.bf16.msra.mxu0 %v406
        %816 = vmatprep.subr.bf16.mxu0 %v411
        %817 = vmatpush1.bf16.msra.mxu0 %v410
        %818 = vmatprep.subr.bf16.mxu0 %v415
        %819 = vmatpush1.bf16.msra.mxu0 %v414
        %820 = vmatprep.subr.bf16.mxu0 %v419
        %821 = vmatpush1.bf16.msra.mxu0 %v418
        %822 = vmatprep.subr.bf16.mxu0 %v423
        %823 = vmatpush1.bf16.msra.mxu0 %v422
        %824 = vmatprep.subr.bf16.mxu0 %v427
        %825 = vmatpush1.bf16.msra.mxu0 %v426
        %826 = vmatprep.subr.bf16.mxu0 0
        %827 = vmatpush1.bf16.msra.mxu0 0
        %828 = vmatprep.subr.bf16.mxu0 0
        %829 = vmatpush1.bf16.msra.mxu0 0
        %830 = vmatprep.subr.bf16.mxu0 0
        %831 = vmatpush1.bf16.msra.mxu0 0
        %832 = vmatprep.subr.bf16.mxu0 0
        %833 = vmatpush1.bf16.msra.mxu0 0
        %834 = vmatprep.subr.bf16.mxu0 0
        %835 = vmatpush1.bf16.msra.mxu0 0
        %836 = vmatprep.subr.bf16.mxu0 0
        %837 = vmatpush1.bf16.msra.mxu0 0
        %838 = vmatprep.subr.bf16.mxu0 0
        %839 = vmatpush1.bf16.msra.mxu0 0
        %840 = vmatprep.subr.bf16.mxu0 0
        %841 = vmatpush1.bf16.msra.mxu0 0
        %842 = vmatprep.mubr.bf16.mxu0 0
        %843 = vmatmul.mubr.bf16.gmra.mrb[0].mxu0 %v809
        %v844 = vpop.f32.mrb[0].mxu0
        %v845 = vadd.f32 0.0, %v844
        %v846 = vpop.f32.mrb[0].mxu0
        %v847 = vadd.f32 0.0, %v846
        %v848 = vpop.f32.mrb[0].mxu0
        %v849 = vpop.f32.mrb[0].mxu0
        %850 = vdwg.mxu0
        %851 = vmatprep.subr.bf16.mxu0 %v401
        %852 = vmatpush1.bf16.msra.mxu0 %v400
        %853 = vmatprep.subr.bf16.mxu0 %v405
        %854 = vmatpush1.bf16.msra.mxu0 %v404
        %855 = vmatprep.subr.bf16.mxu0 %v409
        %856 = vmatpush1.bf16.msra.mxu0 %v408
        %857 = vmatprep.subr.bf16.mxu0 %v413
        %858 = vmatpush1.bf16.msra.mxu0 %v412
        %859 = vmatprep.subr.bf16.mxu0 %v417
        %860 = vmatpush1.bf16.msra.mxu0 %v416
        %861 = vmatprep.subr.bf16.mxu0 %v421
        %862 = vmatpush1.bf16.msra.mxu0 %v420
        %863 = vmatprep.subr.bf16.mxu0 %v425
        %864 = vmatpush1.bf16.msra.mxu0 %v424
        %865 = vmatprep.subr.bf16.mxu0 %v429
        %866 = vmatpush1.bf16.msra.mxu0 %v428
        %867 = vmatprep.subr.bf16.mxu0 0
        %868 = vmatpush1.bf16.msra.mxu0 0
        %869 = vmatprep.subr.bf16.mxu0 0
        %870 = vmatpush1.bf16.msra.mxu0 0
        %871 = vmatprep.subr.bf16.mxu0 0
        %872 = vmatpush1.bf16.msra.mxu0 0
        %873 = vmatprep.subr.bf16.mxu0 0
        %874 = vmatpush1.bf16.msra.mxu0 0
        %875 = vmatprep.subr.bf16.mxu0 0
        %876 = vmatpush1.bf16.msra.mxu0 0
        %877 = vmatprep.subr.bf16.mxu0 0
        %878 = vmatpush1.bf16.msra.mxu0 0
        %879 = vmatprep.subr.bf16.mxu0 0
        %880 = vmatpush1.bf16.msra.mxu0 0
        %881 = vmatprep.subr.bf16.mxu0 0
        %882 = vmatpush1.bf16.msra.mxu0 0
        %883 = vmatprep.mubr.bf16.mxu0 0
        %884 = vmatmul.mubr.bf16.gmra.mrb[0].mxu0 %v809
        %v885 = vpop.f32.mrb[0].mxu0
        %v886 = vadd.f32 0.0, %v885
        %v887 = vpop.f32.mrb[0].mxu0
        %v888 = vadd.f32 0.0, %v887
        %v889 = vpop.f32.mrb[0].mxu0
        %v890 = vpop.f32.mrb[0].mxu0
        %891 = vdwg.mxu0
        %v892 = vadd.f32 %v805, %v845
        %v893 = vadd.f32 %v806, %v847
        %v894 = vadd.f32 %v807, %v886
        %v895 = vadd.f32 %v808, %v888
        %v896 = vxor.u32 %v892, 2147483648
        %v897 = vmul.f32 %v896, 1.442695
        %v898 = vpow.pop %v897
        %v899 = vadd.f32 %v898, 1.0
        %v900 = vrcp.pop %v899
        %v901 = vmul.f32 1.0, %v900
        %v902 = vxor.u32 %v893, 2147483648
        %v903 = vmul.f32 %v902, 1.442695
        %v904 = vpow.pop %v903
        %v905 = vadd.f32 %v904, 1.0
        %v906 = vrcp.pop %v905
        %v907 = vmul.f32 1.0, %v906
        %v908 = vtanh.pop %v894
        %v909 = vxor.u32 %v895, 2147483648
        %v910 = vmul.f32 %v909, 1.442695
        %v911 = vpow.pop %v910
        %v912 = vadd.f32 %v911, 1.0
        %v913 = vrcp.pop %v912
        %v914 = vmul.f32 1.0, %v913
        %v915 = vmul.f32 %v907, %v801
        %v916 = vmul.f32 %v901, %v908
        %v917 = vadd.f32 %v915, %v916
        %v918 = vtanh.pop %v917
        %v919 = vmul.f32 %v914, %v918
        %s920 = scalar_lea.vmem %s227, 128 [#allocation4]
        %v921 = vld [vmem:[%s920] sm:$0xff]
        %v922 = vld [vmem:[%s920 + $0x8] sm:$0xff]
        %v923 = vld [vmem:[%s920 + $0x10] sm:$0xff]
        %v924 = vld [vmem:[%s920 + $0x18] sm:$0xff]
        %v925 = vpack.c.bf16 %v919, %v919
        %926 = vmatprep.subr.bf16.mxu0 %v399
        %927 = vmatpush1.bf16.msra.mxu0 %v398
        %928 = vmatprep.subr.bf16.mxu0 %v403
        %929 = vmatpush1.bf16.msra.mxu0 %v402
        %930 = vmatprep.subr.bf16.mxu0 %v407
        %931 = vmatpush1.bf16.msra.mxu0 %v406
        %932 = vmatprep.subr.bf16.mxu0 %v411
        %933 = vmatpush1.bf16.msra.mxu0 %v410
        %934 = vmatprep.subr.bf16.mxu0 %v415
        %935 = vmatpush1.bf16.msra.mxu0 %v414
        %936 = vmatprep.subr.bf16.mxu0 %v419
        %937 = vmatpush1.bf16.msra.mxu0 %v418
        %938 = vmatprep.subr.bf16.mxu0 %v423
        %939 = vmatpush1.bf16.msra.mxu0 %v422
        %940 = vmatprep.subr.bf16.mxu0 %v427
        %941 = vmatpush1.bf16.msra.mxu0 %v426
        %942 = vmatprep.subr.bf16.mxu0 0
        %943 = vmatpush1.bf16.msra.mxu0 0
        %944 = vmatprep.subr.bf16.mxu0 0
        %945 = vmatpush1.bf16.msra.mxu0 0
        %946 = vmatprep.subr.bf16.mxu0 0
        %947 = vmatpush1.bf16.msra.mxu0 0
        %948 = vmatprep.subr.bf16.mxu0 0
        %949 = vmatpush1.bf16.msra.mxu0 0
        %950 = vmatprep.subr.bf16.mxu0 0
        %951 = vmatpush1.bf16.msra.mxu0 0
        %952 = vmatprep.subr.bf16.mxu0 0
        %953 = vmatpush1.bf16.msra.mxu0 0
        %954 = vmatprep.subr.bf16.mxu0 0
        %955 = vmatpush1.bf16.msra.mxu0 0
        %956 = vmatprep.subr.bf16.mxu0 0
        %957 = vmatpush1.bf16.msra.mxu0 0
        %958 = vmatprep.mubr.bf16.mxu0 0
        %959 = vmatmul.mubr.bf16.gmra.mrb[0].mxu0 %v925
        %v960 = vpop.f32.mrb[0].mxu0
        %v961 = vadd.f32 0.0, %v960
        %v962 = vpop.f32.mrb[0].mxu0
        %v963 = vadd.f32 0.0, %v962
        %v964 = vpop.f32.mrb[0].mxu0
        %v965 = vpop.f32.mrb[0].mxu0
        %966 = vdwg.mxu0
        %967 = vmatprep.subr.bf16.mxu0 %v401
        %968 = vmatpush1.bf16.msra.mxu0 %v400
        %969 = vmatprep.subr.bf16.mxu0 %v405
        %970 = vmatpush1.bf16.msra.mxu0 %v404
        %971 = vmatprep.subr.bf16.mxu0 %v409
        %972 = vmatpush1.bf16.msra.mxu0 %v408
        %973 = vmatprep.subr.bf16.mxu0 %v413
        %974 = vmatpush1.bf16.msra.mxu0 %v412
        %975 = vmatprep.subr.bf16.mxu0 %v417
        %976 = vmatpush1.bf16.msra.mxu0 %v416
        %977 = vmatprep.subr.bf16.mxu0 %v421
        %978 = vmatpush1.bf16.msra.mxu0 %v420
        %979 = vmatprep.subr.bf16.mxu0 %v425
        %980 = vmatpush1.bf16.msra.mxu0 %v424
        %981 = vmatprep.subr.bf16.mxu0 %v429
        %982 = vmatpush1.bf16.msra.mxu0 %v428
        %983 = vmatprep.subr.bf16.mxu0 0
        %984 = vmatpush1.bf16.msra.mxu0 0
        %985 = vmatprep.subr.bf16.mxu0 0
        %986 = vmatpush1.bf16.msra.mxu0 0
        %987 = vmatprep.subr.bf16.mxu0 0
        %988 = vmatpush1.bf16.msra.mxu0 0
        %989 = vmatprep.subr.bf16.mxu0 0
        %990 = vmatpush1.bf16.msra.mxu0 0
        %991 = vmatprep.subr.bf16.mxu0 0
        %992 = vmatpush1.bf16.msra.mxu0 0
        %993 = vmatprep.subr.bf16.mxu0 0
        %994 = vmatpush1.bf16.msra.mxu0 0
        %995 = vmatprep.subr.bf16.mxu0 0
        %996 = vmatpush1.bf16.msra.mxu0 0
        %997 = vmatprep.subr.bf16.mxu0 0
        %998 = vmatpush1.bf16.msra.mxu0 0
        %999 = vmatprep.mubr.bf16.mxu0 0
        %1000 = vmatmul.mubr.bf16.gmra.mrb[0].mxu0 %v925
        %v1001 = vpop.f32.mrb[0].mxu0
        %v1002 = vadd.f32 0.0, %v1001
        %v1003 = vpop.f32.mrb[0].mxu0
        %v1004 = vadd.f32 0.0, %v1003
        %v1005 = vpop.f32.mrb[0].mxu0
        %v1006 = vpop.f32.mrb[0].mxu0
        %1007 = vdwg.mxu0
        %v1008 = vadd.f32 %v921, %v961
        %v1009 = vadd.f32 %v922, %v963
        %v1010 = vadd.f32 %v923, %v1002
        %v1011 = vadd.f32 %v924, %v1004
        %v1012 = vxor.u32 %v1008, 2147483648
        %v1013 = vmul.f32 %v1012, 1.442695
        %v1014 = vpow.pop %v1013
        %v1015 = vadd.f32 %v1014, 1.0
        %v1016 = vrcp.pop %v1015
        %v1017 = vmul.f32 1.0, %v1016
        %v1018 = vxor.u32 %v1009, 2147483648
        %v1019 = vmul.f32 %v1018, 1.442695
        %v1020 = vpow.pop %v1019
        %v1021 = vadd.f32 %v1020, 1.0
        %v1022 = vrcp.pop %v1021
        %v1023 = vmul.f32 1.0, %v1022
        %v1024 = vtanh.pop %v1010
        %v1025 = vxor.u32 %v1011, 2147483648
        %v1026 = vmul.f32 %v1025, 1.442695
        %v1027 = vpow.pop %v1026
        %v1028 = vadd.f32 %v1027, 1.0
        %v1029 = vrcp.pop %v1028
        %v1030 = vmul.f32 1.0, %v1029
        %v1031 = vmul.f32 %v1023, %v917
        %v1032 = vmul.f32 %v1017, %v1024
        %v1033 = vadd.f32 %v1031, %v1032
        %v1034 = vtanh.pop %v1033
        %v1035 = vmul.f32 %v1030, %v1034
        %s1036 = scalar_lea.vmem %s227, 160 [#allocation4]
        %v1037 = vld [vmem:[%s1036] sm:$0xff]
        %v1038 = vld [vmem:[%s1036 + $0x8] sm:$0xff]
        %v1039 = vld [vmem:[%s1036 + $0x10] sm:$0xff]
        %v1040 = vld [vmem:[%s1036 + $0x18] sm:$0xff]
        %v1041 = vpack.c.bf16 %v1035, %v1035
        %1042 = vmatprep.subr.bf16.mxu0 %v399
        %1043 = vmatpush1.bf16.msra.mxu0 %v398
        %1044 = vmatprep.subr.bf16.mxu0 %v403
        %1045 = vmatpush1.bf16.msra.mxu0 %v402
        %1046 = vmatprep.subr.bf16.mxu0 %v407
        %1047 = vmatpush1.bf16.msra.mxu0 %v406
        %1048 = vmatprep.subr.bf16.mxu0 %v411
        %1049 = vmatpush1.bf16.msra.mxu0 %v410
        %1050 = vmatprep.subr.bf16.mxu0 %v415
        %1051 = vmatpush1.bf16.msra.mxu0 %v414
        %1052 = vmatprep.subr.bf16.mxu0 %v419
        %1053 = vmatpush1.bf16.msra.mxu0 %v418
        %1054 = vmatprep.subr.bf16.mxu0 %v423
        %1055 = vmatpush1.bf16.msra.mxu0 %v422
        %1056 = vmatprep.subr.bf16.mxu0 %v427
        %1057 = vmatpush1.bf16.msra.mxu0 %v426
        %1058 = vmatprep.subr.bf16.mxu0 0
        %1059 = vmatpush1.bf16.msra.mxu0 0
        %1060 = vmatprep.subr.bf16.mxu0 0
        %1061 = vmatpush1.bf16.msra.mxu0 0
        %1062 = vmatprep.subr.bf16.mxu0 0
        %1063 = vmatpush1.bf16.msra.mxu0 0
        %1064 = vmatprep.subr.bf16.mxu0 0
        %1065 = vmatpush1.bf16.msra.mxu0 0
        %1066 = vmatprep.subr.bf16.mxu0 0
        %1067 = vmatpush1.bf16.msra.mxu0 0
        %1068 = vmatprep.subr.bf16.mxu0 0
        %1069 = vmatpush1.bf16.msra.mxu0 0
        %1070 = vmatprep.subr.bf16.mxu0 0
        %1071 = vmatpush1.bf16.msra.mxu0 0
        %1072 = vmatprep.subr.bf16.mxu0 0
        %1073 = vmatpush1.bf16.msra.mxu0 0
        %1074 = vmatprep.mubr.bf16.mxu0 0
        %1075 = vmatmul.mubr.bf16.gmra.mrb[0].mxu0 %v1041
        %v1076 = vpop.f32.mrb[0].mxu0
        %v1077 = vadd.f32 0.0, %v1076
        %v1078 = vpop.f32.mrb[0].mxu0
        %v1079 = vadd.f32 0.0, %v1078
        %v1080 = vpop.f32.mrb[0].mxu0
        %v1081 = vpop.f32.mrb[0].mxu0
        %1082 = vdwg.mxu0
        %1083 = vmatprep.subr.bf16.mxu0 %v401
        %1084 = vmatpush1.bf16.msra.mxu0 %v400
        %1085 = vmatprep.subr.bf16.mxu0 %v405
        %1086 = vmatpush1.bf16.msra.mxu0 %v404
        %1087 = vmatprep.subr.bf16.mxu0 %v409
        %1088 = vmatpush1.bf16.msra.mxu0 %v408
        %1089 = vmatprep.subr.bf16.mxu0 %v413
        %1090 = vmatpush1.bf16.msra.mxu0 %v412
        %1091 = vmatprep.subr.bf16.mxu0 %v417
        %1092 = vmatpush1.bf16.msra.mxu0 %v416
        %1093 = vmatprep.subr.bf16.mxu0 %v421
        %1094 = vmatpush1.bf16.msra.mxu0 %v420
        %1095 = vmatprep.subr.bf16.mxu0 %v425
        %1096 = vmatpush1.bf16.msra.mxu0 %v424
        %1097 = vmatprep.subr.bf16.mxu0 %v429
        %1098 = vmatpush1.bf16.msra.mxu0 %v428
        %1099 = vmatprep.subr.bf16.mxu0 0
        %1100 = vmatpush1.bf16.msra.mxu0 0
        %1101 = vmatprep.subr.bf16.mxu0 0
        %1102 = vmatpush1.bf16.msra.mxu0 0
        %1103 = vmatprep.subr.bf16.mxu0 0
        %1104 = vmatpush1.bf16.msra.mxu0 0
        %1105 = vmatprep.subr.bf16.mxu0 0
        %1106 = vmatpush1.bf16.msra.mxu0 0
        %1107 = vmatprep.subr.bf16.mxu0 0
        %1108 = vmatpush1.bf16.msra.mxu0 0
        %1109 = vmatprep.subr.bf16.mxu0 0
        %1110 = vmatpush1.bf16.msra.mxu0 0
        %1111 = vmatprep.subr.bf16.mxu0 0
        %1112 = vmatpush1.bf16.msra.mxu0 0
        %1113 = vmatprep.subr.bf16.mxu0 0
        %1114 = vmatpush1.bf16.msra.mxu0 0
        %1115 = vmatprep.mubr.bf16.mxu0 0
        %1116 = vmatmul.mubr.bf16.gmra.mrb[0].mxu0 %v1041
        %v1117 = vpop.f32.mrb[0].mxu0
        %v1118 = vadd.f32 0.0, %v1117
        %v1119 = vpop.f32.mrb[0].mxu0
        %v1120 = vadd.f32 0.0, %v1119
        %v1121 = vpop.f32.mrb[0].mxu0
        %v1122 = vpop.f32.mrb[0].mxu0
        %1123 = vdwg.mxu0
        %v1124 = vadd.f32 %v1037, %v1077
        %v1125 = vadd.f32 %v1038, %v1079
        %v1126 = vadd.f32 %v1039, %v1118
        %v1127 = vadd.f32 %v1040, %v1120
        %v1128 = vxor.u32 %v1124, 2147483648
        %v1129 = vmul.f32 %v1128, 1.442695
        %v1130 = vpow.pop %v1129
        %v1131 = vadd.f32 %v1130, 1.0
        %v1132 = vrcp.pop %v1131
        %v1133 = vmul.f32 1.0, %v1132
        %v1134 = vxor.u32 %v1125, 2147483648
        %v1135 = vmul.f32 %v1134, 1.442695
        %v1136 = vpow.pop %v1135
        %v1137 = vadd.f32 %v1136, 1.0
        %v1138 = vrcp.pop %v1137
        %v1139 = vmul.f32 1.0, %v1138
        %v1140 = vtanh.pop %v1126
        %v1141 = vxor.u32 %v1127, 2147483648
        %v1142 = vmul.f32 %v1141, 1.442695
        %v1143 = vpow.pop %v1142
        %v1144 = vadd.f32 %v1143, 1.0
        %v1145 = vrcp.pop %v1144
        %v1146 = vmul.f32 1.0, %v1145
        %v1147 = vmul.f32 %v1139, %v1033
        %v1148 = vmul.f32 %v1133, %v1140
        %v1149 = vadd.f32 %v1147, %v1148
        %v1150 = vtanh.pop %v1149
        %v1151 = vmul.f32 %v1146, %v1150
        %s1152 = scalar_lea.vmem %s227, 192 [#allocation4]
        %v1153 = vld [vmem:[%s1152] sm:$0xff]
        %v1154 = vld [vmem:[%s1152 + $0x8] sm:$0xff]
        %v1155 = vld [vmem:[%s1152 + $0x10] sm:$0xff]
        %v1156 = vld [vmem:[%s1152 + $0x18] sm:$0xff]
        %v1157 = vpack.c.bf16 %v1151, %v1151
        %1158 = vmatprep.subr.bf16.mxu0 %v399
        %1159 = vmatpush1.bf16.msra.mxu0 %v398
        %1160 = vmatprep.subr.bf16.mxu0 %v403
        %1161 = vmatpush1.bf16.msra.mxu0 %v402
        %1162 = vmatprep.subr.bf16.mxu0 %v407
        %1163 = vmatpush1.bf16.msra.mxu0 %v406
        %1164 = vmatprep.subr.bf16.mxu0 %v411
        %1165 = vmatpush1.bf16.msra.mxu0 %v410
        %1166 = vmatprep.subr.bf16.mxu0 %v415
        %1167 = vmatpush1.bf16.msra.mxu0 %v414
        %1168 = vmatprep.subr.bf16.mxu0 %v419
        %1169 = vmatpush1.bf16.msra.mxu0 %v418
        %1170 = vmatprep.subr.bf16.mxu0 %v423
        %1171 = vmatpush1.bf16.msra.mxu0 %v422
        %1172 = vmatprep.subr.bf16.mxu0 %v427
        %1173 = vmatpush1.bf16.msra.mxu0 %v426
        %1174 = vmatprep.subr.bf16.mxu0 0
        %1175 = vmatpush1.bf16.msra.mxu0 0
        %1176 = vmatprep.subr.bf16.mxu0 0
        %1177 = vmatpush1.bf16.msra.mxu0 0
        %1178 = vmatprep.subr.bf16.mxu0 0
        %1179 = vmatpush1.bf16.msra.mxu0 0
        %1180 = vmatprep.subr.bf16.mxu0 0
        %1181 = vmatpush1.bf16.msra.mxu0 0
        %1182 = vmatprep.subr.bf16.mxu0 0
        %1183 = vmatpush1.bf16.msra.mxu0 0
        %1184 = vmatprep.subr.bf16.mxu0 0
        %1185 = vmatpush1.bf16.msra.mxu0 0
        %1186 = vmatprep.subr.bf16.mxu0 0
        %1187 = vmatpush1.bf16.msra.mxu0 0
        %1188 = vmatprep.subr.bf16.mxu0 0
        %1189 = vmatpush1.bf16.msra.mxu0 0
        %1190 = vmatprep.mubr.bf16.mxu0 0
        %1191 = vmatmul.mubr.bf16.gmra.mrb[0].mxu0 %v1157
        %v1192 = vpop.f32.mrb[0].mxu0
        %v1193 = vadd.f32 0.0, %v1192
        %v1194 = vpop.f32.mrb[0].mxu0
        %v1195 = vadd.f32 0.0, %v1194
        %v1196 = vpop.f32.mrb[0].mxu0
        %v1197 = vpop.f32.mrb[0].mxu0
        %1198 = vdwg.mxu0
        %1199 = vmatprep.subr.bf16.mxu0 %v401
        %1200 = vmatpush1.bf16.msra.mxu0 %v400
        %1201 = vmatprep.subr.bf16.mxu0 %v405
        %1202 = vmatpush1.bf16.msra.mxu0 %v404
        %1203 = vmatprep.subr.bf16.mxu0 %v409
        %1204 = vmatpush1.bf16.msra.mxu0 %v408
        %1205 = vmatprep.subr.bf16.mxu0 %v413
        %1206 = vmatpush1.bf16.msra.mxu0 %v412
        %1207 = vmatprep.subr.bf16.mxu0 %v417
        %1208 = vmatpush1.bf16.msra.mxu0 %v416
        %1209 = vmatprep.subr.bf16.mxu0 %v421
        %1210 = vmatpush1.bf16.msra.mxu0 %v420
        %1211 = vmatprep.subr.bf16.mxu0 %v425
        %1212 = vmatpush1.bf16.msra.mxu0 %v424
        %1213 = vmatprep.subr.bf16.mxu0 %v429
        %1214 = vmatpush1.bf16.msra.mxu0 %v428
        %1215 = vmatprep.subr.bf16.mxu0 0
        %1216 = vmatpush1.bf16.msra.mxu0 0
        %1217 = vmatprep.subr.bf16.mxu0 0
        %1218 = vmatpush1.bf16.msra.mxu0 0
        %1219 = vmatprep.subr.bf16.mxu0 0
        %1220 = vmatpush1.bf16.msra.mxu0 0
        %1221 = vmatprep.subr.bf16.mxu0 0
        %1222 = vmatpush1.bf16.msra.mxu0 0
        %1223 = vmatprep.subr.bf16.mxu0 0
        %1224 = vmatpush1.bf16.msra.mxu0 0
        %1225 = vmatprep.subr.bf16.mxu0 0
        %1226 = vmatpush1.bf16.msra.mxu0 0
        %1227 = vmatprep.subr.bf16.mxu0 0
        %1228 = vmatpush1.bf16.msra.mxu0 0
        %1229 = vmatprep.subr.bf16.mxu0 0
        %1230 = vmatpush1.bf16.msra.mxu0 0
        %1231 = vmatprep.mubr.bf16.mxu0 0
        %1232 = vmatmul.mubr.bf16.gmra.mrb[0].mxu0 %v1157
        %v1233 = vpop.f32.mrb[0].mxu0
        %v1234 = vadd.f32 0.0, %v1233
        %v1235 = vpop.f32.mrb[0].mxu0
        %v1236 = vadd.f32 0.0, %v1235
        %v1237 = vpop.f32.mrb[0].mxu0
        %v1238 = vpop.f32.mrb[0].mxu0
        %1239 = vdwg.mxu0
        %v1240 = vadd.f32 %v1153, %v1193
        %v1241 = vadd.f32 %v1154, %v1195
        %v1242 = vadd.f32 %v1155, %v1234
        %v1243 = vadd.f32 %v1156, %v1236
        %v1244 = vxor.u32 %v1240, 2147483648
        %v1245 = vmul.f32 %v1244, 1.442695
        %v1246 = vpow.pop %v1245
        %v1247 = vadd.f32 %v1246, 1.0
        %v1248 = vrcp.pop %v1247
        %v1249 = vmul.f32 1.0, %v1248
        %v1250 = vxor.u32 %v1241, 2147483648
        %v1251 = vmul.f32 %v1250, 1.442695
        %v1252 = vpow.pop %v1251
        %v1253 = vadd.f32 %v1252, 1.0
        %v1254 = vrcp.pop %v1253
        %v1255 = vmul.f32 1.0, %v1254
        %v1256 = vtanh.pop %v1242
        %v1257 = vxor.u32 %v1243, 2147483648
        %v1258 = vmul.f32 %v1257, 1.442695
        %v1259 = vpow.pop %v1258
        %v1260 = vadd.f32 %v1259, 1.0
        %v1261 = vrcp.pop %v1260
        %v1262 = vmul.f32 1.0, %v1261
        %v1263 = vmul.f32 %v1255, %v1149
        %v1264 = vmul.f32 %v1249, %v1256
        %v1265 = vadd.f32 %v1263, %v1264
        %v1266 = vtanh.pop %v1265
        %v1267 = vmul.f32 %v1262, %v1266
        %s1268 = scalar_lea.vmem %s227, 224 [#allocation4]
        %v1269 = vld [vmem:[%s1268] sm:$0xff]
        %v1270 = vld [vmem:[%s1268 + $0x8] sm:$0xff]
        %v1271 = vld [vmem:[%s1268 + $0x10] sm:$0xff]
        %v1272 = vld [vmem:[%s1268 + $0x18] sm:$0xff]
        %v1273 = vpack.c.bf16 %v1267, %v1267
        %1274 = vmatprep.subr.bf16.mxu0 %v399
        %1275 = vmatpush1.bf16.msra.mxu0 %v398
        %1276 = vmatprep.subr.bf16.mxu0 %v403
        %1277 = vmatpush1.bf16.msra.mxu0 %v402
        %1278 = vmatprep.subr.bf16.mxu0 %v407
        %1279 = vmatpush1.bf16.msra.mxu0 %v406
        %1280 = vmatprep.subr.bf16.mxu0 %v411
        %1281 = vmatpush1.bf16.msra.mxu0 %v410
        %1282 = vmatprep.subr.bf16.mxu0 %v415
        %1283 = vmatpush1.bf16.msra.mxu0 %v414
        %1284 = vmatprep.subr.bf16.mxu0 %v419
        %1285 = vmatpush1.bf16.msra.mxu0 %v418
        %1286 = vmatprep.subr.bf16.mxu0 %v423
        %1287 = vmatpush1.bf16.msra.mxu0 %v422
        %1288 = vmatprep.subr.bf16.mxu0 %v427
        %1289 = vmatpush1.bf16.msra.mxu0 %v426
        %1290 = vmatprep.subr.bf16.mxu0 0
        %1291 = vmatpush1.bf16.msra.mxu0 0
        %1292 = vmatprep.subr.bf16.mxu0 0
        %1293 = vmatpush1.bf16.msra.mxu0 0
        %1294 = vmatprep.subr.bf16.mxu0 0
        %1295 = vmatpush1.bf16.msra.mxu0 0
        %1296 = vmatprep.subr.bf16.mxu0 0
        %1297 = vmatpush1.bf16.msra.mxu0 0
        %1298 = vmatprep.subr.bf16.mxu0 0
        %1299 = vmatpush1.bf16.msra.mxu0 0
        %1300 = vmatprep.subr.bf16.mxu0 0
        %1301 = vmatpush1.bf16.msra.mxu0 0
        %1302 = vmatprep.subr.bf16.mxu0 0
        %1303 = vmatpush1.bf16.msra.mxu0 0
        %1304 = vmatprep.subr.bf16.mxu0 0
        %1305 = vmatpush1.bf16.msra.mxu0 0
        %1306 = vmatprep.mubr.bf16.mxu0 0
        %1307 = vmatmul.mubr.bf16.gmra.mrb[0].mxu0 %v1273
        %v1308 = vpop.f32.mrb[0].mxu0
        %v1309 = vadd.f32 0.0, %v1308
        %v1310 = vpop.f32.mrb[0].mxu0
        %v1311 = vadd.f32 0.0, %v1310
        %v1312 = vpop.f32.mrb[0].mxu0
        %v1313 = vpop.f32.mrb[0].mxu0
        %1314 = vdwg.mxu0
        %1315 = vmatprep.subr.bf16.mxu0 %v401
        %1316 = vmatpush1.bf16.msra.mxu0 %v400
        %1317 = vmatprep.subr.bf16.mxu0 %v405
        %1318 = vmatpush1.bf16.msra.mxu0 %v404
        %1319 = vmatprep.subr.bf16.mxu0 %v409
        %1320 = vmatpush1.bf16.msra.mxu0 %v408
        %1321 = vmatprep.subr.bf16.mxu0 %v413
        %1322 = vmatpush1.bf16.msra.mxu0 %v412
        %1323 = vmatprep.subr.bf16.mxu0 %v417
        %1324 = vmatpush1.bf16.msra.mxu0 %v416
        %1325 = vmatprep.subr.bf16.mxu0 %v421
        %1326 = vmatpush1.bf16.msra.mxu0 %v420
        %1327 = vmatprep.subr.bf16.mxu0 %v425
        %1328 = vmatpush1.bf16.msra.mxu0 %v424
        %1329 = vmatprep.subr.bf16.mxu0 %v429
        %1330 = vmatpush1.bf16.msra.mxu0 %v428
        %1331 = vmatprep.subr.bf16.mxu0 0
        %1332 = vmatpush1.bf16.msra.mxu0 0
        %1333 = vmatprep.subr.bf16.mxu0 0
        %1334 = vmatpush1.bf16.msra.mxu0 0
        %1335 = vmatprep.subr.bf16.mxu0 0
        %1336 = vmatpush1.bf16.msra.mxu0 0
        %1337 = vmatprep.subr.bf16.mxu0 0
        %1338 = vmatpush1.bf16.msra.mxu0 0
        %1339 = vmatprep.subr.bf16.mxu0 0
        %1340 = vmatpush1.bf16.msra.mxu0 0
        %1341 = vmatprep.subr.bf16.mxu0 0
        %1342 = vmatpush1.bf16.msra.mxu0 0
        %1343 = vmatprep.subr.bf16.mxu0 0
        %1344 = vmatpush1.bf16.msra.mxu0 0
        %1345 = vmatprep.subr.bf16.mxu0 0
        %1346 = vmatpush1.bf16.msra.mxu0 0
        %1347 = vmatprep.mubr.bf16.mxu0 0
        %1348 = vmatmul.mubr.bf16.gmra.mrb[0].mxu0 %v1273
        %v1349 = vpop.f32.mrb[0].mxu0
        %v1350 = vadd.f32 0.0, %v1349
        %v1351 = vpop.f32.mrb[0].mxu0
        %v1352 = vadd.f32 0.0, %v1351
        %v1353 = vpop.f32.mrb[0].mxu0
        %v1354 = vpop.f32.mrb[0].mxu0
        %1355 = vdwg.mxu0
        %v1356 = vadd.f32 %v1269, %v1309
        %v1357 = vadd.f32 %v1270, %v1311
        %v1358 = vadd.f32 %v1271, %v1350
        %v1359 = vadd.f32 %v1272, %v1352
        %v1360 = vxor.u32 %v1356, 2147483648
        %v1361 = vmul.f32 %v1360, 1.442695
        %v1362 = vpow.pop %v1361
        %v1363 = vadd.f32 %v1362, 1.0
        %v1364 = vrcp.pop %v1363
        %v1365 = vmul.f32 1.0, %v1364
        %v1366 = vxor.u32 %v1357, 2147483648
        %v1367 = vmul.f32 %v1366, 1.442695
        %v1368 = vpow.pop %v1367
        %v1369 = vadd.f32 %v1368, 1.0
        %v1370 = vrcp.pop %v1369
        %v1371 = vmul.f32 1.0, %v1370
        %v1372 = vtanh.pop %v1358
        %v1373 = vxor.u32 %v1359, 2147483648
        %v1374 = vmul.f32 %v1373, 1.442695
        %v1375 = vpow.pop %v1374
        %v1376 = vadd.f32 %v1375, 1.0
        %v1377 = vrcp.pop %v1376
        %v1378 = vmul.f32 1.0, %v1377
        %v1379 = vmul.f32 %v1371, %v1265
        %v1380 = vmul.f32 %v1365, %v1372
        %v1381 = vadd.f32 %v1379, %v1380
        %v1382 = vtanh.pop %v1381
        %v1383 = vmul.f32 %v1378, %v1382
        %1384 = vst [vmem:[#allocation2] sm:$0xff] %v1383
        %1385 = vst [vmem:[#allocation3] sm:$0xff] %v1381
        %p1386 = scmp.eq.s32.totalorder %s25, 1
        // Predicated region
        $region53: #{tpu_custom_call.1} parent=35 // pred_check
          %p1387 = pneg %p1386
        $region54: #{tpu_custom_call.1} parent=35 // pred_check_branch
          %1389 = sbr.rel (%p1387) target = $region56
        $region55: #{tpu_custom_call.1} parent=35 // pred_region
          %v1390 = vpack.c.bf16 %v1383, %v1383
          %v1391 = vld [vmem:[#allocation9] sm:$0xf]
          %v1392 = vld [vmem:[#allocation9 + $0x4] sm:$0xf]
          %v1393 = vld [vmem:[#allocation9 + $0x8] sm:$0xf]
          %v1394 = vld [vmem:[#allocation9 + $0xc] sm:$0xf]
          %v1395 = vld [vmem:[#allocation9 + $0x10] sm:$0xf]
          %v1396 = vld [vmem:[#allocation9 + $0x14] sm:$0xf]
          %v1397 = vld [vmem:[#allocation9 + $0x18] sm:$0xf]
          %v1398 = vld [vmem:[#allocation9 + $0x1c] sm:$0xf]
          %v1399 = vld [vmem:[#allocation9 + $0x20] sm:$0xf]
          %v1400 = vld [vmem:[#allocation9 + $0x24] sm:$0xf]
          %v1401 = vld [vmem:[#allocation9 + $0x28] sm:$0xf]
          %v1402 = vld [vmem:[#allocation9 + $0x2c] sm:$0xf]
          %v1403 = vld [vmem:[#allocation9 + $0x30] sm:$0xf]
          %v1404 = vld [vmem:[#allocation9 + $0x34] sm:$0xf]
          %v1405 = vld [vmem:[#allocation9 + $0x38] sm:$0xf]
          %v1406 = vld [vmem:[#allocation9 + $0x3c] sm:$0xf]
          %v1407 = vld [vmem:[%s3] sm:$0x1]
          %v1409 = vlaneseq
          %v1410 = vshrl.u32 %v1409, 7
          %v1411 = vsub.s32 0, %v1410
          %v1412 = vrot.slane %v1407, %v1411
          %v1430 = vunpack.c.l.b16 %v1391
          %v1431 = vunpack.c.l.b16 %v1392
          %v1432 = vunpack.c.l.b16 %v1393
          %v1433 = vunpack.c.l.b16 %v1394
          %v1434 = vunpack.c.l.b16 %v1395
          %v1435 = vunpack.c.l.b16 %v1396
          %v1436 = vunpack.c.l.b16 %v1397
          %v1437 = vunpack.c.l.b16 %v1398
          %v1438 = vunpack.c.l.b16 %v1399
          %v1439 = vunpack.c.l.b16 %v1400
          %v1440 = vunpack.c.l.b16 %v1401
          %v1441 = vunpack.c.l.b16 %v1402
          %v1442 = vunpack.c.l.b16 %v1403
          %v1443 = vunpack.c.l.b16 %v1404
          %v1444 = vunpack.c.l.b16 %v1405
          %v1445 = vunpack.c.l.b16 %v1406
          %v1446 = vpack.c.b16 %v1431, %v1430
          %v1447 = vpack.c.b16 %v1433, %v1432
          %v1448 = vpack.c.b16 %v1435, %v1434
          %v1449 = vpack.c.b16 %v1437, %v1436
          %v1450 = vpack.c.b16 %v1439, %v1438
          %v1451 = vpack.c.b16 %v1441, %v1440
          %v1452 = vpack.c.b16 %v1443, %v1442
          %v1453 = vpack.c.b16 %v1445, %v1444
          %1462 = vmatprep.subr.bf16.mxu0 0
          %1463 = vmatpush1.bf16.msra.mxu0 %v1446
          %1464 = vmatprep.subr.bf16.mxu0 0
          %1465 = vmatpush1.bf16.msra.mxu0 %v1447
          %1466 = vmatprep.subr.bf16.mxu0 0
          %1467 = vmatpush1.bf16.msra.mxu0 %v1448
          %1468 = vmatprep.subr.bf16.mxu0 0
          %1469 = vmatpush1.bf16.msra.mxu0 %v1449
          %1470 = vmatprep.subr.bf16.mxu0 0
          %1471 = vmatpush1.bf16.msra.mxu0 %v1450
          %1472 = vmatprep.subr.bf16.mxu0 0
          %1473 = vmatpush1.bf16.msra.mxu0 %v1451
          %1474 = vmatprep.subr.bf16.mxu0 0
          %1475 = vmatpush1.bf16.msra.mxu0 %v1452
          %1476 = vmatprep.subr.bf16.mxu0 0
          %1477 = vmatpush1.bf16.msra.mxu0 %v1453
          %1478 = vmatprep.subr.bf16.mxu0 0
          %1479 = vmatpush1.bf16.msra.mxu0 0
          %1480 = vmatprep.subr.bf16.mxu0 0
          %1481 = vmatpush1.bf16.msra.mxu0 0
          %1482 = vmatprep.subr.bf16.mxu0 0
          %1483 = vmatpush1.bf16.msra.mxu0 0
          %1484 = vmatprep.subr.bf16.mxu0 0
          %1485 = vmatpush1.bf16.msra.mxu0 0
          %1486 = vmatprep.subr.bf16.mxu0 0
          %1487 = vmatpush1.bf16.msra.mxu0 0
          %1488 = vmatprep.subr.bf16.mxu0 0
          %1489 = vmatpush1.bf16.msra.mxu0 0
          %1490 = vmatprep.subr.bf16.mxu0 0
          %1491 = vmatpush1.bf16.msra.mxu0 0
          %1492 = vmatprep.subr.bf16.mxu0 0
          %1493 = vmatpush1.bf16.msra.mxu0 0
          %1494 = vmatprep.mubr.bf16.mxu0 0
          %1495 = vmatmul.mubr.bf16.gmra.mrb[0].mxu0 %v1390
          %v1496 = vpop.f32.mrb[0].mxu0
          %v1497 = vadd.f32 %v1412, %v1496
          %v1498 = vpop.f32.mrb[0].mxu0
          %v1499 = vpop.f32.mrb[0].mxu0
          %v1500 = vpop.f32.mrb[0].mxu0
          %1501 = vdwg.mxu0
          %1502 = vst [vmem:[#allocation10] sm:$0xff] %v1497
        $region56: #{tpu_custom_call.1} parent=35 // pred_fallthru
          _
        // Predicated region
        $region57: #{tpu_custom_call.1} parent=35 // pred_check
          %p1503 = pneg %p141
        $region58: #{tpu_custom_call.1} parent=35 // pred_check_branch
          %1505 = sbr.rel (%p1503) target = $region60
        $region59: #{tpu_custom_call.1} parent=35 // pred_region
          %s1507 = ssub.s32 128, 128
          %1508 = vsyncadd [#allocation6], %s1507
          %s1509 = smul.addr %s24, 128
          %s1510 = scalar_lea.hbm %s4, %s1509
          %s1512 = sshll.u32 [#allocation10], 4
          %s1513 = int_to_ptr.vmem [resolvable:$true] %s1512
          %1515 = dma.vmem_to_hbm [thread:$0]  %s1513, 128, %s1510, [#allocation6]
        $region60: #{tpu_custom_call.1} parent=35 // pred_fallthru
          _
        // Predicated region
        $region61: #{tpu_custom_call.1} parent=35 // pred_check
          %p1516 = pneg %p141
        $region62: #{tpu_custom_call.1} parent=35 // pred_check_branch
          %1518 = sbr.rel (%p1516) target = $region64
        $region63: #{tpu_custom_call.1} parent=35 // pred_region
          %1519 = dma.done [#allocation6], 128
        $region64: #{tpu_custom_call.1} parent=35 // pred_fallthru
          _
      $region36: #{tpu_custom_call.1} parent=5 // pred_fallthru
        _
      %p1520 = scmp.le.s32.totalorder 2, %s15
      // Predicated region
      $region65: #{tpu_custom_call.1} parent=5 // pred_check
        %p1521 = pneg %p1520
      $region66: #{tpu_custom_call.1} parent=5 // pred_check_branch
        %1523 = sbr.rel (%p1521) target = $region68
      $region67: #{tpu_custom_call.1} parent=5 // pred_region
        %s1524 = ssub.s32 %s15, 2
      $region68: #{tpu_custom_call.1} parent=5 // pred_fallthru
        _
    $region6: #{tpu_custom_call.1} parent=1 // loop_footer
      %s19 = sadd.s32 1, %s15
    $region7: #{tpu_custom_call.1} parent=1 // loop_footer_branch
      %14 = sbr.rel target = $region3
    $region8: #{tpu_custom_call.1} parent=1 // loop_exit
      _
    %1525 = vsyncpa [#allocation5], 1
    %s1526 = scalar_lea.sflag [#allocation5], 1
    %1527 = vsyncpa %s1526, 1
    %1528 = vsyncpa [#allocation8], 1
    %1529 = vsyncpa [#allocation6], 1
    %s1530 = scalar_lea.sflag [#allocation6], 1
    %1531 = vsyncpa %s1530, 1

</llo_original>
